<compile_context>
chip_gen: v5e
topology: v5e:2x2
jax: 0.10.0
libtpu: 0.0.40
codegen_flags: <defaults>
</compile_context>

<pallas_src>
import functools

import jax
import jax.numpy as jnp
from jax.experimental import pallas as pl
from jax.experimental.pallas import tpu as pltpu


def _round_up(x, m):
    return (x + m - 1) // m * m


# ----------------------------------------------------------------------------
# Pallas kernel: tiled fused  y = [relu]((x @ w) * scale + bias [+ residual])
#   grid = (M tiles, N tiles, K tiles); f32 VMEM accumulator across K;
#   bf16 MXU operands, f32 epilogue.
# ----------------------------------------------------------------------------
def _fused_matmul_bn_kernel(x_ref, w_ref, s_ref, b_ref, *rest,
                            relu: bool, has_residual: bool):
    if has_residual:
        res_ref, o_ref, acc_ref = rest
    else:
        o_ref, acc_ref = rest

    k = pl.program_id(2)

    @pl.when(k == 0)
    def _():
        acc_ref[...] = jnp.zeros_like(acc_ref)

    # bf16 operands feed the MXU at native rate; accumulate in f32.
    acc_ref[...] += jnp.dot(x_ref[...].astype(jnp.bfloat16),
                            w_ref[...].astype(jnp.bfloat16),
                            preferred_element_type=jnp.float32)

    @pl.when(k == pl.num_programs(2) - 1)
    def _():
        y = acc_ref[...] * s_ref[...] + b_ref[...]
        if has_residual:
            y = y + res_ref[...].astype(jnp.float32)
        if relu:
            y = jnp.maximum(y, 0.0)
        o_ref[...] = y.astype(o_ref.dtype)


def fused_matmul_bn(x2d, w, scale, bias, residual=None, relu=True,
                    out_dtype=None):
    """y = [relu]((x2d @ w) * scale + bias [+ residual]); tiled over M, N, K."""
    M, K = x2d.shape
    Kw, Cout = w.shape
    assert Kw == K
    out_dtype = jnp.dtype(out_dtype) if out_dtype is not None else x2d.dtype
    has_res = residual is not None

    # ----- tile selection -----------------------------------------------------
    # M: large tiles (roofline), but keep >=2 row blocks when possible so the
    # parallel grid axis can be split across TensorCores.
    if M >= 1024:
        tm = 512
    elif M >= 512:
        tm = 256
    elif M >= 128:
        tm = 128
    else:
        tm = _round_up(M, 8)
    Mp = _round_up(M, tm)

    # N: pad channels to a multiple of 128 so every store is lane-dense
    # (unmasked vst); prefer 256-wide N tiles to fill the 2x256^2 MXU.
    Np = _round_up(Cout, 128)
    tn = 256 if Np % 256 == 0 else 128

    # K: single full-K block when small, otherwise 512-wide reduction chunks.
    if K > 1024:
        tk = 512
        Kp = _round_up(K, tk)
    else:
        tk = K
        Kp = K

    grid = (Mp // tm, Np // tn, Kp // tk)

    # ----- zero-padding (exact for matmul + affine epilogue) -------------------
    xp = x2d
    if Mp != M or Kp != K:
        xp = jnp.pad(x2d, ((0, Mp - M), (0, Kp - K)))
    wp = w.astype(jnp.bfloat16)
    if Kp != K or Np != Cout:
        wp = jnp.pad(wp, ((0, Kp - K), (0, Np - Cout)))
    sp = jnp.pad(scale.astype(jnp.float32), (0, Np - Cout)).reshape(1, Np)
    bp = jnp.pad(bias.astype(jnp.float32), (0, Np - Cout)).reshape(1, Np)

    in_specs = [
        pl.BlockSpec((tm, tk), lambda i, j, k: (i, k)),
        pl.BlockSpec((tk, tn), lambda i, j, k: (k, j)),
        pl.BlockSpec((1, tn), lambda i, j, k: (0, j)),
        pl.BlockSpec((1, tn), lambda i, j, k: (0, j)),
    ]
    args = [xp, wp, sp, bp]
    if has_res:
        rp = residual
        if rp.shape != (Mp, Np):
            rp = jnp.pad(rp, ((0, Mp - M), (0, Np - Cout)))
        in_specs.append(pl.BlockSpec((tm, tn), lambda i, j, k: (i, j)))
        args.append(rp)

    # ----- explicit VMEM budget (double buffers + f32 accumulator) -------------
    vmem_need = (2 * (tm * tk * xp.dtype.itemsize          # x tile (dbl buf)
                      + tk * tn * 2                         # bf16 weight tile
                      + 2 * tn * 4)                         # scale + bias
                 + 2 * tm * tn * out_dtype.itemsize         # output tile
                 + tm * tn * 4)                             # f32 accumulator
    if has_res:
        vmem_need += 2 * tm * tn * args[-1].dtype.itemsize
    vmem_limit = int(min(max(4 * vmem_need, 32 * 2**20), 48 * 2**20))

    cost = pl.CostEstimate(
        flops=2 * Mp * Kp * Np,
        transcendentals=0,
        bytes_accessed=(xp.size * xp.dtype.itemsize
                        + wp.size * 2
                        + Mp * Np * out_dtype.itemsize
                        + (args[-1].size * args[-1].dtype.itemsize
                           if has_res else 0)),
    )

    kernel = functools.partial(_fused_matmul_bn_kernel,
                               relu=relu, has_residual=has_res)
    out = pl.pallas_call(
        kernel,
        out_shape=jax.ShapeDtypeStruct((Mp, Np), out_dtype),
        grid=grid,
        in_specs=in_specs,
        out_specs=pl.BlockSpec((tm, tn), lambda i, j, k: (i, j)),
        scratch_shapes=[pltpu.VMEM((tm, tn), jnp.float32)],
        compiler_params=pltpu.CompilerParams(
            dimension_semantics=("parallel", "parallel", "arbitrary"),
            vmem_limit_bytes=vmem_limit),
        cost_estimate=cost,
    )(*args)

    if Mp != M or Np != Cout:
        out = out[:M, :Cout]
    return out


# ----------------------------------------------------------------------------
# Glue helpers (plain JAX): BN folding, im2col
# ----------------------------------------------------------------------------
def fold_bn(gamma, beta, mean, var, eps=1e-5):
    scale = gamma / jnp.sqrt(var + eps)
    bias = beta - mean * scale
    return scale, bias


def im2col_3x3(x_nhwc, stride):
    """3x3, pad=1 im2col; feature order (dy, dx, cin) along the last axis."""
    # TODO(synk): replace the materialized im2col with an in-kernel 9-tap
    # accumulation (shifted index_maps / VMEM-resident halo) to remove the
    # ~9x HBM read amplification; mitigated here by bf16 patches + K tiling.
    N, H, W, C = x_nhwc.shape
    xp = jnp.pad(x_nhwc, ((0, 0), (1, 1), (1, 1), (0, 0)))
    Ho = (H + 2 - 3) // stride + 1
    Wo = (W + 2 - 3) // stride + 1
    cols = []
    for dy in range(3):
        for dx in range(3):
            cols.append(xp[:, dy:dy + (Ho - 1) * stride + 1:stride,
                              dx:dx + (Wo - 1) * stride + 1:stride, :])
    patches = jnp.concatenate(cols, axis=-1)  # (N, Ho, Wo, 9*C)
    return patches, Ho, Wo


# ----------------------------------------------------------------------------
# Parameter construction (deterministic, mirrors nn.Module __init__ shapes)
# ----------------------------------------------------------------------------
def init_params(key, inplanes, midplanes, planes, is_downsample):
    keys = iter(jax.random.split(key, 24))

    def conv_w(cout, cin, kh, kw):
        fan_in = cin * kh * kw
        bound = 1.0 / jnp.sqrt(jnp.float32(fan_in))
        return jax.random.uniform(next(keys), (cout, cin, kh, kw),
                                  jnp.float32, -bound, bound)

    def bn_params(c):
        gamma = 1.0 + 0.1 * jax.random.normal(next(keys), (c,), jnp.float32)
        beta = 0.1 * jax.random.normal(next(keys), (c,), jnp.float32)
        mean = 0.05 * jax.random.normal(next(keys), (c,), jnp.float32)
        var = jax.random.uniform(next(keys), (c,), jnp.float32, 0.5, 1.5)
        return (gamma, beta, mean, var)

    params = {
        "conv1_w": conv_w(midplanes, inplanes, 1, 1),
        "bn1": bn_params(midplanes),
        "conv2_w": conv_w(midplanes, midplanes, 3, 3),
        "bn2": bn_params(midplanes),
        "conv3_w": conv_w(planes, midplanes, 1, 1),
        "bn3": bn_params(planes),
    }
    if is_downsample:
        params["down_w"] = conv_w(planes, inplanes, 1, 1)
        params["bn_down"] = bn_params(planes)
    return params


# ----------------------------------------------------------------------------
# Bottleneck forward (Pallas-backed)
# ----------------------------------------------------------------------------
def bottleneck_forward(x_nchw, params, stride, is_downsample):
    # TODO(synk): NCHW<->NHWC transposes and the strided downsample slice are
    # full-tensor XLA passes outside the kernels; fold them into the first/last
    # kernel's BlockSpecs (strided index_map) to save HBM bandwidth.
    x = jnp.transpose(x_nchw, (0, 2, 3, 1))  # NCHW -> NHWC
    N, H, W, Cin = x.shape

    # --- conv1 (1x1) + bn1 + relu --------------------------------------------
    w1 = jnp.transpose(params["conv1_w"][:, :, 0, 0], (1, 0))        # (Cin, mid)
    s1, b1 = fold_bn(*params["bn1"])
    mid = w1.shape[1]
    out = fused_matmul_bn(x.reshape(N * H * W, Cin), w1, s1, b1,
                          relu=True, out_dtype=jnp.bfloat16)
    out = out.reshape(N, H, W, mid)

    # --- conv2 (3x3, stride, pad=1) + bn2 + relu -------------------------------
    patches, Ho, Wo = im2col_3x3(out, stride)                 # bf16 patches
    w2 = jnp.transpose(params["conv2_w"], (2, 3, 1, 0)).reshape(9 * mid, mid)
    s2, b2 = fold_bn(*params["bn2"])
    out2d = fused_matmul_bn(patches.reshape(N * Ho * Wo, 9 * mid), w2, s2, b2,
                            relu=True, out_dtype=jnp.bfloat16)

    # --- identity / downsample -------------------------------------------------
    if is_downsample:
        xs = x[:, ::stride, ::stride, :]
        wd = jnp.transpose(params["down_w"][:, :, 0, 0], (1, 0))
        sd, bd = fold_bn(*params["bn_down"])
        identity = fused_matmul_bn(xs.reshape(N * Ho * Wo, Cin), wd, sd, bd,
                                   relu=False, out_dtype=jnp.float32)
    else:
        identity = x.reshape(N * H * W, Cin).astype(jnp.float32)

    # --- conv3 (1x1) + bn3 + residual add + relu (all fused in-kernel) ----------
    w3 = jnp.transpose(params["conv3_w"][:, :, 0, 0], (1, 0))        # (mid, planes)
    s3, b3 = fold_bn(*params["bn3"])
    planes = w3.shape[1]
    out = fused_matmul_bn(out2d, w3, s3, b3, residual=identity,
                          relu=True, out_dtype=jnp.float32)
    out = out.reshape(N, Ho, Wo, planes)
    return jnp.transpose(out, (0, 3, 1, 2))  # NHWC -> NCHW


# ----------------------------------------------------------------------------
# Pure-JAX reference (lax.conv, f32) for correctness checking
# ----------------------------------------------------------------------------
def bottleneck_reference(x, params, stride, is_downsample, eps=1e-5):
    dn = ("NCHW", "OIHW", "NCHW")

    def conv(x, w, s, pad):
        return jax.lax.conv_general_dilated(x, w, (s, s), pad,
                                            dimension_numbers=dn)

    def bn(x, p):
        g, b, m, v = p
        sh = (1, -1, 1, 1)
        return (x - m.reshape(sh)) / jnp.sqrt(v.reshape(sh) + eps) \
            * g.reshape(sh) + b.reshape(sh)

    out = jax.nn.relu(bn(conv(x, params["conv1_w"], 1, "VALID"), params["bn1"]))
    out = jax.nn.relu(bn(conv(out, params["conv2_w"], stride,
                              [(1, 1), (1, 1)]), params["bn2"]))
    out = bn(conv(out, params["conv3_w"], 1, "VALID"), params["bn3"])
    if is_downsample:
        identity = bn(conv(x, params["down_w"], stride, "VALID"),
                      params["bn_down"])
    else:
        identity = x
    return jax.nn.relu(out + identity)


# ----------------------------------------------------------------------------
if __name__ == "__main__":
    # Bottleneck(midplanes=8, inplanes=4, planes=16, stride=2, is_downsample=True)
    inplanes, midplanes, planes = 4, 8, 16
    stride, is_downsample = 2, True

    key = jax.random.PRNGKey(0)
    kx, kp = jax.random.split(key)
    x = jax.random.normal(kx, (2, inplanes, 16, 16), jnp.float32)  # NCHW
    params = init_params(kp, inplanes, midplanes, planes, is_downsample)

    fwd = jax.jit(lambda xi, pi: bottleneck_forward(xi, pi, stride,
                                                    is_downsample))
    out = jax.block_until_ready(fwd(x, params))

    ref = jax.block_until_ready(
        bottleneck_reference(x, params, stride, is_downsample))

    assert out.shape == ref.shape == (2, planes, 8, 8), out.shape
    # bf16 matmul operands / intermediates -> looser tolerance vs f32 reference.
    max_err = float(jnp.max(jnp.abs(out - ref)))
    assert jnp.allclose(out, ref, atol=5e-2, rtol=5e-2), max_err

    print("KERNEL_OK")
</pallas_src>

<mosaic_0001>
module attributes {stable_mosaic.version = 11 : i64} {
  func.func @_fused_matmul_bn_kernel(%arg0: i32, %arg1: i32, %arg2: i32, %arg3: memref<256x4xf32, #tpu.memory_space<vmem>>, %arg4: memref<4x128xbf16, #tpu.memory_space<vmem>>, %arg5: memref<1x128xf32, #tpu.memory_space<vmem>>, %arg6: memref<1x128xf32, #tpu.memory_space<vmem>>, %arg7: memref<256x128xbf16, #tpu.memory_space<vmem>>, %arg8: memref<256x128xf32, #tpu.memory_space<vmem>>) attributes {dimension_semantics = [#tpu.dimension_semantics<parallel>, #tpu.dimension_semantics<parallel>, #tpu.dimension_semantics<arbitrary>], iteration_bounds = array<i64: 2, 1, 1>, scalar_prefetch = 0 : i64, scratch_operands = 1 : i64, tpu.core_type = #tpu.core_type<tc>, window_params = [{transform_indices = @transform_0, window_bounds = array<i64: 256, 4>}, {transform_indices = @transform_1, window_bounds = array<i64: 4, 128>}, {transform_indices = @transform_2, window_bounds = array<i64: 1, 128>}, {transform_indices = @transform_3, window_bounds = array<i64: 1, 128>}, {transform_indices = @transform_4, window_bounds = array<i64: 256, 128>}]} {
    %c0_i32 = arith.constant 0 : i32
    %0 = arith.cmpi eq, %arg2, %c0_i32 : i32
    %1 = arith.extui %0 : i1 to i32
    %c0_i32_0 = arith.constant 0 : i32
    %2 = arith.cmpi ne, %1, %c0_i32_0 : i32
    scf.if %2 {
      %cst_10 = arith.constant 0.000000e+00 : f32
      %13 = vector.broadcast %cst_10 : f32 to vector<256x128xf32>
      %c0_11 = arith.constant 0 : index
      %c0_12 = arith.constant 0 : index
      %14 = vector.load %arg8[%c0_11, %c0_12] : memref<256x128xf32, #tpu.memory_space<vmem>>, vector<256x128xf32>
      tpu.vector_store %arg8[%c0_11, %c0_12], %13 {strides = array<i32>} : memref<256x128xf32, #tpu.memory_space<vmem>>, vector<256x128xf32>,
    } else {
    }
    %c0 = arith.constant 0 : index
    %c0_1 = arith.constant 0 : index
    %3 = vector.load %arg8[%c0, %c0_1] : memref<256x128xf32, #tpu.memory_space<vmem>>, vector<256x128xf32>
    %c0_2 = arith.constant 0 : index
    %c0_3 = arith.constant 0 : index
    %4 = vector.load %arg3[%c0_2, %c0_3] : memref<256x4xf32, #tpu.memory_space<vmem>>, vector<256x4xf32>
    %5 = arith.truncf %4 : vector<256x4xf32> to vector<256x4xbf16>
    %c0_4 = arith.constant 0 : index
    %c0_5 = arith.constant 0 : index
    %6 = vector.load %arg4[%c0_4, %c0_5] : memref<4x128xbf16, #tpu.memory_space<vmem>>, vector<4x128xbf16>
    %cst = arith.constant dense<0.000000e+00> : vector<256x128xf32>
    %7 = tpu.matmul %5, %6, %cst {dimension_numbers = #tpu.dot_dimension_numbers<[1], [0], [0], [1], [0, 0, 1, 1], [], []>} : vector<256x4xbf16>, vector<4x128xbf16>, vector<256x128xf32> -> vector<256x128xf32>
    %8 = arith.addf %3, %7 : vector<256x128xf32>
    %c0_6 = arith.constant 0 : index
    %c0_7 = arith.constant 0 : index
    %9 = vector.load %arg8[%c0_6, %c0_7] : memref<256x128xf32, #tpu.memory_space<vmem>>, vector<256x128xf32>
    tpu.vector_store %arg8[%c0_6, %c0_7], %8 {strides = array<i32>} : memref<256x128xf32, #tpu.memory_space<vmem>>, vector<256x128xf32>,
    %c0_i32_8 = arith.constant 0 : i32
    %10 = arith.cmpi eq, %arg2, %c0_i32_8 : i32
    %11 = arith.extui %10 : i1 to i32
    %c0_i32_9 = arith.constant 0 : i32
    %12 = arith.cmpi ne, %11, %c0_i32_9 : i32
    scf.if %12 {
      %c0_10 = arith.constant 0 : index
      %c0_11 = arith.constant 0 : index
      %13 = vector.load %arg8[%c0_10, %c0_11] : memref<256x128xf32, #tpu.memory_space<vmem>>, vector<256x128xf32>
      %c0_12 = arith.constant 0 : index
      %c0_13 = arith.constant 0 : index
      %14 = vector.load %arg5[%c0_12, %c0_13] : memref<1x128xf32, #tpu.memory_space<vmem>>, vector<1x128xf32>
      %15 = vector.broadcast %14 : vector<1x128xf32> to vector<256x128xf32>
      %16 = arith.mulf %13, %15 : vector<256x128xf32>
      %c0_14 = arith.constant 0 : index
      %c0_15 = arith.constant 0 : index
      %17 = vector.load %arg6[%c0_14, %c0_15] : memref<1x128xf32, #tpu.memory_space<vmem>>, vector<1x128xf32>
      %18 = vector.broadcast %17 : vector<1x128xf32> to vector<256x128xf32>
      %19 = arith.addf %16, %18 : vector<256x128xf32>
      %cst_16 = arith.constant 0.000000e+00 : f32
      %20 = vector.broadcast %cst_16 : f32 to vector<256x128xf32>
      %21 = arith.maximumf %19, %20 : vector<256x128xf32>
      %22 = arith.truncf %21 : vector<256x128xf32> to vector<256x128xbf16>
      %c0_17 = arith.constant 0 : index
      %c0_18 = arith.constant 0 : index
      %23 = vector.load %arg7[%c0_17, %c0_18] : memref<256x128xbf16, #tpu.memory_space<vmem>>, vector<256x128xbf16>
      tpu.vector_store %arg7[%c0_17, %c0_18], %22 {strides = array<i32>} : memref<256x128xbf16, #tpu.memory_space<vmem>>, vector<256x128xbf16>,
    } else {
    }
    return
  }
  func.func @transform_0(%arg0: i32, %arg1: i32, %arg2: i32) -> (i32, i32) {
    %c0_i32 = arith.constant 0 : i32
    return %arg0, %arg2 : i32, i32
  }
  func.func @transform_1(%arg0: i32, %arg1: i32, %arg2: i32) -> (i32, i32) {
    %c0_i32 = arith.constant 0 : i32
    return %arg2, %arg1 : i32, i32
  }
  func.func @transform_2(%arg0: i32, %arg1: i32, %arg2: i32) -> (i32, i32) {
    %c0_i32 = arith.constant 0 : i32
    %c0_i32_0 = arith.constant 0 : i32
    return %c0_i32, %arg1 : i32, i32
  }
  func.func @transform_3(%arg0: i32, %arg1: i32, %arg2: i32) -> (i32, i32) {
    %c0_i32 = arith.constant 0 : i32
    %c0_i32_0 = arith.constant 0 : i32
    return %c0_i32, %arg1 : i32, i32
  }
  func.func @transform_4(%arg0: i32, %arg1: i32, %arg2: i32) -> (i32, i32) {
    %c0_i32 = arith.constant 0 : i32
    return %arg0, %arg1 : i32, i32
  }
}

module attributes {stable_mosaic.version = 11 : i64} {
  func.func @_fused_matmul_bn_kernel(%arg0: i32, %arg1: i32, %arg2: i32, %arg3: memref<128x72xbf16, #tpu.memory_space<vmem>>, %arg4: memref<72x128xbf16, #tpu.memory_space<vmem>>, %arg5: memref<1x128xf32, #tpu.memory_space<vmem>>, %arg6: memref<1x128xf32, #tpu.memory_space<vmem>>, %arg7: memref<128x128xbf16, #tpu.memory_space<vmem>>, %arg8: memref<128x128xf32, #tpu.memory_space<vmem>>) attributes {dimension_semantics = [#tpu.dimension_semantics<parallel>, #tpu.dimension_semantics<parallel>, #tpu.dimension_semantics<arbitrary>], iteration_bounds = array<i64: 1, 1, 1>, scalar_prefetch = 0 : i64, scratch_operands = 1 : i64, tpu.core_type = #tpu.core_type<tc>, window_params = [{transform_indices = @transform_0, window_bounds = array<i64: 128, 72>}, {transform_indices = @transform_1, window_bounds = array<i64: 72, 128>}, {transform_indices = @transform_2, window_bounds = array<i64: 1, 128>}, {transform_indices = @transform_3, window_bounds = array<i64: 1, 128>}, {transform_indices = @transform_4, window_bounds = array<i64: 128, 128>}]} {
    %c0_i32 = arith.constant 0 : i32
    %0 = arith.cmpi eq, %arg2, %c0_i32 : i32
    %1 = arith.extui %0 : i1 to i32
    %c0_i32_0 = arith.constant 0 : i32
    %2 = arith.cmpi ne, %1, %c0_i32_0 : i32
    scf.if %2 {
      %cst_10 = arith.constant 0.000000e+00 : f32
      %12 = vector.broadcast %cst_10 : f32 to vector<128x128xf32>
      %c0_11 = arith.constant 0 : index
      %c0_12 = arith.constant 0 : index
      %13 = vector.load %arg8[%c0_11, %c0_12] : memref<128x128xf32, #tpu.memory_space<vmem>>, vector<128x128xf32>
      tpu.vector_store %arg8[%c0_11, %c0_12], %12 {strides = array<i32>} : memref<128x128xf32, #tpu.memory_space<vmem>>, vector<128x128xf32>,
    } else {
    }
    %c0 = arith.constant 0 : index
    %c0_1 = arith.constant 0 : index
    %3 = vector.load %arg8[%c0, %c0_1] : memref<128x128xf32, #tpu.memory_space<vmem>>, vector<128x128xf32>
    %c0_2 = arith.constant 0 : index
    %c0_3 = arith.constant 0 : index
    %4 = vector.load %arg3[%c0_2, %c0_3] : memref<128x72xbf16, #tpu.memory_space<vmem>>, vector<128x72xbf16>
    %c0_4 = arith.constant 0 : index
    %c0_5 = arith.constant 0 : index
    %5 = vector.load %arg4[%c0_4, %c0_5] : memref<72x128xbf16, #tpu.memory_space<vmem>>, vector<72x128xbf16>
    %cst = arith.constant dense<0.000000e+00> : vector<128x128xf32>
    %6 = tpu.matmul %4, %5, %cst {dimension_numbers = #tpu.dot_dimension_numbers<[1], [0], [0], [1], [0, 0, 1, 1], [], []>} : vector<128x72xbf16>, vector<72x128xbf16>, vector<128x128xf32> -> vector<128x128xf32>
    %7 = arith.addf %3, %6 : vector<128x128xf32>
    %c0_6 = arith.constant 0 : index
    %c0_7 = arith.constant 0 : index
    %8 = vector.load %arg8[%c0_6, %c0_7] : memref<128x128xf32, #tpu.memory_space<vmem>>, vector<128x128xf32>
    tpu.vector_store %arg8[%c0_6, %c0_7], %7 {strides = array<i32>} : memref<128x128xf32, #tpu.memory_space<vmem>>, vector<128x128xf32>,
    %c0_i32_8 = arith.constant 0 : i32
    %9 = arith.cmpi eq, %arg2, %c0_i32_8 : i32
    %10 = arith.extui %9 : i1 to i32
    %c0_i32_9 = arith.constant 0 : i32
    %11 = arith.cmpi ne, %10, %c0_i32_9 : i32
    scf.if %11 {
      %c0_10 = arith.constant 0 : index
      %c0_11 = arith.constant 0 : index
      %12 = vector.load %arg8[%c0_10, %c0_11] : memref<128x128xf32, #tpu.memory_space<vmem>>, vector<128x128xf32>
      %c0_12 = arith.constant 0 : index
      %c0_13 = arith.constant 0 : index
      %13 = vector.load %arg5[%c0_12, %c0_13] : memref<1x128xf32, #tpu.memory_space<vmem>>, vector<1x128xf32>
      %14 = vector.broadcast %13 : vector<1x128xf32> to vector<128x128xf32>
      %15 = arith.mulf %12, %14 : vector<128x128xf32>
      %c0_14 = arith.constant 0 : index
      %c0_15 = arith.constant 0 : index
      %16 = vector.load %arg6[%c0_14, %c0_15] : memref<1x128xf32, #tpu.memory_space<vmem>>, vector<1x128xf32>
      %17 = vector.broadcast %16 : vector<1x128xf32> to vector<128x128xf32>
      %18 = arith.addf %15, %17 : vector<128x128xf32>
      %cst_16 = arith.constant 0.000000e+00 : f32
      %19 = vector.broadcast %cst_16 : f32 to vector<128x128xf32>
      %20 = arith.maximumf %18, %19 : vector<128x128xf32>
      %21 = arith.truncf %20 : vector<128x128xf32> to vector<128x128xbf16>
      %c0_17 = arith.constant 0 : index
      %c0_18 = arith.constant 0 : index
      %22 = vector.load %arg7[%c0_17, %c0_18] : memref<128x128xbf16, #tpu.memory_space<vmem>>, vector<128x128xbf16>
      tpu.vector_store %arg7[%c0_17, %c0_18], %21 {strides = array<i32>} : memref<128x128xbf16, #tpu.memory_space<vmem>>, vector<128x128xbf16>,
    } else {
    }
    return
  }
  func.func @transform_0(%arg0: i32, %arg1: i32, %arg2: i32) -> (i32, i32) {
    %c0_i32 = arith.constant 0 : i32
    return %arg0, %arg2 : i32, i32
  }
  func.func @transform_1(%arg0: i32, %arg1: i32, %arg2: i32) -> (i32, i32) {
    %c0_i32 = arith.constant 0 : i32
    return %arg2, %arg1 : i32, i32
  }
  func.func @transform_2(%arg0: i32, %arg1: i32, %arg2: i32) -> (i32, i32) {
    %c0_i32 = arith.constant 0 : i32
    %c0_i32_0 = arith.constant 0 : i32
    return %c0_i32, %arg1 : i32, i32
  }
  func.func @transform_3(%arg0: i32, %arg1: i32, %arg2: i32) -> (i32, i32) {
    %c0_i32 = arith.constant 0 : i32
    %c0_i32_0 = arith.constant 0 : i32
    return %c0_i32, %arg1 : i32, i32
  }
  func.func @transform_4(%arg0: i32, %arg1: i32, %arg2: i32) -> (i32, i32) {
    %c0_i32 = arith.constant 0 : i32
    return %arg0, %arg1 : i32, i32
  }
}

module attributes {stable_mosaic.version = 11 : i64} {
  func.func @_fused_matmul_bn_kernel(%arg0: i32, %arg1: i32, %arg2: i32, %arg3: memref<128x4xf32, #tpu.memory_space<vmem>>, %arg4: memref<4x128xbf16, #tpu.memory_space<vmem>>, %arg5: memref<1x128xf32, #tpu.memory_space<vmem>>, %arg6: memref<1x128xf32, #tpu.memory_space<vmem>>, %arg7: memref<128x128xf32, #tpu.memory_space<vmem>>, %arg8: memref<128x128xf32, #tpu.memory_space<vmem>>) attributes {dimension_semantics = [#tpu.dimension_semantics<parallel>, #tpu.dimension_semantics<parallel>, #tpu.dimension_semantics<arbitrary>], iteration_bounds = array<i64: 1, 1, 1>, scalar_prefetch = 0 : i64, scratch_operands = 1 : i64, tpu.core_type = #tpu.core_type<tc>, window_params = [{transform_indices = @transform_0, window_bounds = array<i64: 128, 4>}, {transform_indices = @transform_1, window_bounds = array<i64: 4, 128>}, {transform_indices = @transform_2, window_bounds = array<i64: 1, 128>}, {transform_indices = @transform_3, window_bounds = array<i64: 1, 128>}, {transform_indices = @transform_4, window_bounds = array<i64: 128, 128>}]} {
    %c0_i32 = arith.constant 0 : i32
    %0 = arith.cmpi eq, %arg2, %c0_i32 : i32
    %1 = arith.extui %0 : i1 to i32
    %c0_i32_0 = arith.constant 0 : i32
    %2 = arith.cmpi ne, %1, %c0_i32_0 : i32
    scf.if %2 {
      %cst_10 = arith.constant 0.000000e+00 : f32
      %13 = vector.broadcast %cst_10 : f32 to vector<128x128xf32>
      %c0_11 = arith.constant 0 : index
      %c0_12 = arith.constant 0 : index
      %14 = vector.load %arg8[%c0_11, %c0_12] : memref<128x128xf32, #tpu.memory_space<vmem>>, vector<128x128xf32>
      tpu.vector_store %arg8[%c0_11, %c0_12], %13 {strides = array<i32>} : memref<128x128xf32, #tpu.memory_space<vmem>>, vector<128x128xf32>,
    } else {
    }
    %c0 = arith.constant 0 : index
    %c0_1 = arith.constant 0 : index
    %3 = vector.load %arg8[%c0, %c0_1] : memref<128x128xf32, #tpu.memory_space<vmem>>, vector<128x128xf32>
    %c0_2 = arith.constant 0 : index
    %c0_3 = arith.constant 0 : index
    %4 = vector.load %arg3[%c0_2, %c0_3] : memref<128x4xf32, #tpu.memory_space<vmem>>, vector<128x4xf32>
    %5 = arith.truncf %4 : vector<128x4xf32> to vector<128x4xbf16>
    %c0_4 = arith.constant 0 : index
    %c0_5 = arith.constant 0 : index
    %6 = vector.load %arg4[%c0_4, %c0_5] : memref<4x128xbf16, #tpu.memory_space<vmem>>, vector<4x128xbf16>
    %cst = arith.constant dense<0.000000e+00> : vector<128x128xf32>
    %7 = tpu.matmul %5, %6, %cst {dimension_numbers = #tpu.dot_dimension_numbers<[1], [0], [0], [1], [0, 0, 1, 1], [], []>} : vector<128x4xbf16>, vector<4x128xbf16>, vector<128x128xf32> -> vector<128x128xf32>
    %8 = arith.addf %3, %7 : vector<128x128xf32>
    %c0_6 = arith.constant 0 : index
    %c0_7 = arith.constant 0 : index
    %9 = vector.load %arg8[%c0_6, %c0_7] : memref<128x128xf32, #tpu.memory_space<vmem>>, vector<128x128xf32>
    tpu.vector_store %arg8[%c0_6, %c0_7], %8 {strides = array<i32>} : memref<128x128xf32, #tpu.memory_space<vmem>>, vector<128x128xf32>,
    %c0_i32_8 = arith.constant 0 : i32
    %10 = arith.cmpi eq, %arg2, %c0_i32_8 : i32
    %11 = arith.extui %10 : i1 to i32
    %c0_i32_9 = arith.constant 0 : i32
    %12 = arith.cmpi ne, %11, %c0_i32_9 : i32
    scf.if %12 {
      %c0_10 = arith.constant 0 : index
      %c0_11 = arith.constant 0 : index
      %13 = vector.load %arg8[%c0_10, %c0_11] : memref<128x128xf32, #tpu.memory_space<vmem>>, vector<128x128xf32>
      %c0_12 = arith.constant 0 : index
      %c0_13 = arith.constant 0 : index
      %14 = vector.load %arg5[%c0_12, %c0_13] : memref<1x128xf32, #tpu.memory_space<vmem>>, vector<1x128xf32>
      %15 = vector.broadcast %14 : vector<1x128xf32> to vector<128x128xf32>
      %16 = arith.mulf %13, %15 : vector<128x128xf32>
      %c0_14 = arith.constant 0 : index
      %c0_15 = arith.constant 0 : index
      %17 = vector.load %arg6[%c0_14, %c0_15] : memref<1x128xf32, #tpu.memory_space<vmem>>, vector<1x128xf32>
      %18 = vector.broadcast %17 : vector<1x128xf32> to vector<128x128xf32>
      %19 = arith.addf %16, %18 : vector<128x128xf32>
      %c0_16 = arith.constant 0 : index
      %c0_17 = arith.constant 0 : index
      %20 = vector.load %arg7[%c0_16, %c0_17] : memref<128x128xf32, #tpu.memory_space<vmem>>, vector<128x128xf32>
      tpu.vector_store %arg7[%c0_16, %c0_17], %19 {strides = array<i32>} : memref<128x128xf32, #tpu.memory_space<vmem>>, vector<128x128xf32>,
    } else {
    }
    return
  }
  func.func @transform_0(%arg0: i32, %arg1: i32, %arg2: i32) -> (i32, i32) {
    %c0_i32 = arith.constant 0 : i32
    return %arg0, %arg2 : i32, i32
  }
  func.func @transform_1(%arg0: i32, %arg1: i32, %arg2: i32) -> (i32, i32) {
    %c0_i32 = arith.constant 0 : i32
    return %arg2, %arg1 : i32, i32
  }
  func.func @transform_2(%arg0: i32, %arg1: i32, %arg2: i32) -> (i32, i32) {
    %c0_i32 = arith.constant 0 : i32
    %c0_i32_0 = arith.constant 0 : i32
    return %c0_i32, %arg1 : i32, i32
  }
  func.func @transform_3(%arg0: i32, %arg1: i32, %arg2: i32) -> (i32, i32) {
    %c0_i32 = arith.constant 0 : i32
    %c0_i32_0 = arith.constant 0 : i32
    return %c0_i32, %arg1 : i32, i32
  }
  func.func @transform_4(%arg0: i32, %arg1: i32, %arg2: i32) -> (i32, i32) {
    %c0_i32 = arith.constant 0 : i32
    return %arg0, %arg1 : i32, i32
  }
}

module attributes {stable_mosaic.version = 11 : i64} {
  func.func @_fused_matmul_bn_kernel(%arg0: i32, %arg1: i32, %arg2: i32, %arg3: memref<128x8xbf16, #tpu.memory_space<vmem>>, %arg4: memref<8x128xbf16, #tpu.memory_space<vmem>>, %arg5: memref<1x128xf32, #tpu.memory_space<vmem>>, %arg6: memref<1x128xf32, #tpu.memory_space<vmem>>, %arg7: memref<128x128xf32, #tpu.memory_space<vmem>>, %arg8: memref<128x128xf32, #tpu.memory_space<vmem>>, %arg9: memref<128x128xf32, #tpu.memory_space<vmem>>) attributes {dimension_semantics = [#tpu.dimension_semantics<parallel>, #tpu.dimension_semantics<parallel>, #tpu.dimension_semantics<arbitrary>], iteration_bounds = array<i64: 1, 1, 1>, scalar_prefetch = 0 : i64, scratch_operands = 1 : i64, tpu.core_type = #tpu.core_type<tc>, window_params = [{transform_indices = @transform_0, window_bounds = array<i64: 128, 8>}, {transform_indices = @transform_1, window_bounds = array<i64: 8, 128>}, {transform_indices = @transform_2, window_bounds = array<i64: 1, 128>}, {transform_indices = @transform_3, window_bounds = array<i64: 1, 128>}, {transform_indices = @transform_4, window_bounds = array<i64: 128, 128>}, {transform_indices = @transform_5, window_bounds = array<i64: 128, 128>}]} {
    %c0_i32 = arith.constant 0 : i32
    %0 = arith.cmpi eq, %arg2, %c0_i32 : i32
    %1 = arith.extui %0 : i1 to i32
    %c0_i32_0 = arith.constant 0 : i32
    %2 = arith.cmpi ne, %1, %c0_i32_0 : i32
    scf.if %2 {
      %cst_10 = arith.constant 0.000000e+00 : f32
      %12 = vector.broadcast %cst_10 : f32 to vector<128x128xf32>
      %c0_11 = arith.constant 0 : index
      %c0_12 = arith.constant 0 : index
      %13 = vector.load %arg9[%c0_11, %c0_12] : memref<128x128xf32, #tpu.memory_space<vmem>>, vector<128x128xf32>
      tpu.vector_store %arg9[%c0_11, %c0_12], %12 {strides = array<i32>} : memref<128x128xf32, #tpu.memory_space<vmem>>, vector<128x128xf32>,
    } else {
    }
    %c0 = arith.constant 0 : index
    %c0_1 = arith.constant 0 : index
    %3 = vector.load %arg9[%c0, %c0_1] : memref<128x128xf32, #tpu.memory_space<vmem>>, vector<128x128xf32>
    %c0_2 = arith.constant 0 : index
    %c0_3 = arith.constant 0 : index
    %4 = vector.load %arg3[%c0_2, %c0_3] : memref<128x8xbf16, #tpu.memory_space<vmem>>, vector<128x8xbf16>
    %c0_4 = arith.constant 0 : index
    %c0_5 = arith.constant 0 : index
    %5 = vector.load %arg4[%c0_4, %c0_5] : memref<8x128xbf16, #tpu.memory_space<vmem>>, vector<8x128xbf16>
    %cst = arith.constant dense<0.000000e+00> : vector<128x128xf32>
    %6 = tpu.matmul %4, %5, %cst {dimension_numbers = #tpu.dot_dimension_numbers<[1], [0], [0], [1], [0, 0, 1, 1], [], []>} : vector<128x8xbf16>, vector<8x128xbf16>, vector<128x128xf32> -> vector<128x128xf32>
    %7 = arith.addf %3, %6 : vector<128x128xf32>
    %c0_6 = arith.constant 0 : index
    %c0_7 = arith.constant 0 : index
    %8 = vector.load %arg9[%c0_6, %c0_7] : memref<128x128xf32, #tpu.memory_space<vmem>>, vector<128x128xf32>
    tpu.vector_store %arg9[%c0_6, %c0_7], %7 {strides = array<i32>} : memref<128x128xf32, #tpu.memory_space<vmem>>, vector<128x128xf32>,
    %c0_i32_8 = arith.constant 0 : i32
    %9 = arith.cmpi eq, %arg2, %c0_i32_8 : i32
    %10 = arith.extui %9 : i1 to i32
    %c0_i32_9 = arith.constant 0 : i32
    %11 = arith.cmpi ne, %10, %c0_i32_9 : i32
    scf.if %11 {
      %c0_10 = arith.constant 0 : index
      %c0_11 = arith.constant 0 : index
      %12 = vector.load %arg9[%c0_10, %c0_11] : memref<128x128xf32, #tpu.memory_space<vmem>>, vector<128x128xf32>
      %c0_12 = arith.constant 0 : index
      %c0_13 = arith.constant 0 : index
      %13 = vector.load %arg5[%c0_12, %c0_13] : memref<1x128xf32, #tpu.memory_space<vmem>>, vector<1x128xf32>
      %14 = vector.broadcast %13 : vector<1x128xf32> to vector<128x128xf32>
      %15 = arith.mulf %12, %14 : vector<128x128xf32>
      %c0_14 = arith.constant 0 : index
      %c0_15 = arith.constant 0 : index
      %16 = vector.load %arg6[%c0_14, %c0_15] : memref<1x128xf32, #tpu.memory_space<vmem>>, vector<1x128xf32>
      %17 = vector.broadcast %16 : vector<1x128xf32> to vector<128x128xf32>
      %18 = arith.addf %15, %17 : vector<128x128xf32>
      %c0_16 = arith.constant 0 : index
      %c0_17 = arith.constant 0 : index
      %19 = vector.load %arg7[%c0_16, %c0_17] : memref<128x128xf32, #tpu.memory_space<vmem>>, vector<128x128xf32>
      %20 = arith.addf %18, %19 : vector<128x128xf32>
      %cst_18 = arith.constant 0.000000e+00 : f32
      %21 = vector.broadcast %cst_18 : f32 to vector<128x128xf32>
      %22 = arith.maximumf %20, %21 : vector<128x128xf32>
      %c0_19 = arith.constant 0 : index
      %c0_20 = arith.constant 0 : index
      %23 = vector.load %arg8[%c0_19, %c0_20] : memref<128x128xf32, #tpu.memory_space<vmem>>, vector<128x128xf32>
      tpu.vector_store %arg8[%c0_19, %c0_20], %22 {strides = array<i32>} : memref<128x128xf32, #tpu.memory_space<vmem>>, vector<128x128xf32>,
    } else {
    }
    return
  }
  func.func @transform_0(%arg0: i32, %arg1: i32, %arg2: i32) -> (i32, i32) {
    %c0_i32 = arith.constant 0 : i32
    return %arg0, %arg2 : i32, i32
  }
  func.func @transform_1(%arg0: i32, %arg1: i32, %arg2: i32) -> (i32, i32) {
    %c0_i32 = arith.constant 0 : i32
    return %arg2, %arg1 : i32, i32
  }
  func.func @transform_2(%arg0: i32, %arg1: i32, %arg2: i32) -> (i32, i32) {
    %c0_i32 = arith.constant 0 : i32
    %c0_i32_0 = arith.constant 0 : i32
    return %c0_i32, %arg1 : i32, i32
  }
  func.func @transform_3(%arg0: i32, %arg1: i32, %arg2: i32) -> (i32, i32) {
    %c0_i32 = arith.constant 0 : i32
    %c0_i32_0 = arith.constant 0 : i32
    return %c0_i32, %arg1 : i32, i32
  }
  func.func @transform_4(%arg0: i32, %arg1: i32, %arg2: i32) -> (i32, i32) {
    %c0_i32 = arith.constant 0 : i32
    return %arg0, %arg1 : i32, i32
  }
  func.func @transform_5(%arg0: i32, %arg1: i32, %arg2: i32) -> (i32, i32) {
    %c0_i32 = arith.constant 0 : i32
    return %arg0, %arg1 : i32, i32
  }
}

</mosaic_0001>

<llo_original>
// kernel: _lambda_.5
$region0: #{_lambda_.5}
  #allocation0 [shape = 'u32[]', space=smem, size = 0x4, offset = 0x4, fixed_abs, tag = 'smem constant byte address 0x4 - core index']
  #allocation1 [shape = 'u32[72,128]{1,0:T(1,128)}', space=vmem, size = 0x9000, scoped, tag = 'internal scratch']
  #allocation2 [shape = 'f32[128,128]{1,0:T(8,128)}', space=vmem, size = 0x10000, scoped, tag = 'scratch operand']
  %s0 = inlined_call_operand.vmem [shape: bf16[128,72], index: 0, kind: input, shape index: {}]
  %s1 = inlined_call_operand.vmem [shape: bf16[72,128], index: 1, kind: input, shape index: {}]
  %s2 = inlined_call_operand.vmem [shape: f32[1,128], index: 2, kind: input, shape index: {}]
  %s3 = inlined_call_operand.vmem [shape: f32[1,128], index: 3, kind: input, shape index: {}]
  %s4 = inlined_call_operand.vmem [shape: bf16[128,128], index: 4, kind: output, shape index: {}]
  %s5 = sld [smem:[#allocation0]]
  $region34: #{_lambda_.5} parent=0
    _
  %s7 = ssub.s32 1, %s5
  %s8 = scalar_select 0, %s7, %s5
  // Predicated region
  $region2: #{_lambda_.5} parent=0 // pred_check
    _
  $region3: #{_lambda_.5} parent=0 // pred_check_branch
    %10 = sbr.rel (0) target = $region5
  $region4: #{_lambda_.5} parent=0 // pred_region
    _
  $region5: #{_lambda_.5} parent=0 // pred_fallthru
    _
  // Predicated region
  $region6: #{_lambda_.5} parent=0 // pred_check
    _
  $region7: #{_lambda_.5} parent=0 // pred_check_branch
    %12 = sbr.rel (0) target = $region9
  $region8: #{_lambda_.5} parent=0 // pred_region
    _
  $region9: #{_lambda_.5} parent=0 // pred_fallthru
    _
  // Predicated region
  $region10: #{_lambda_.5} parent=0 // pred_check
    _
  $region11: #{_lambda_.5} parent=0 // pred_check_branch
    %14 = sbr.rel (0) target = $region13
  $region12: #{_lambda_.5} parent=0 // pred_region
    _
  $region13: #{_lambda_.5} parent=0 // pred_fallthru
    _
  // Predicated region
  $region14: #{_lambda_.5} parent=0 // pred_check
    _
  $region15: #{_lambda_.5} parent=0 // pred_check_branch
    %16 = sbr.rel (0) target = $region17
  $region16: #{_lambda_.5} parent=0 // pred_region
    _
  $region17: #{_lambda_.5} parent=0 // pred_fallthru
    _
  %p18 = scmp.eq.s32.totalorder 0, 0
  // Predicated region
  $region18: #{_lambda_.5} parent=0 // pred_check
    %p19 = pneg %p18
  $region19: #{_lambda_.5} parent=0 // pred_check_branch
    %21 = sbr.rel (%p19) target = $region21
  $region20: #{_lambda_.5} parent=0 // pred_region
    %22 = vst [vmem:[#allocation2] sm:$0xff] 0.0
    %23 = vst [vmem:[#allocation2 + $0x8] sm:$0xff] 0.0
    %24 = vst [vmem:[#allocation2 + $0x10] sm:$0xff] 0.0
    %25 = vst [vmem:[#allocation2 + $0x18] sm:$0xff] 0.0
    %26 = vst [vmem:[#allocation2 + $0x20] sm:$0xff] 0.0
    %27 = vst [vmem:[#allocation2 + $0x28] sm:$0xff] 0.0
    %28 = vst [vmem:[#allocation2 + $0x30] sm:$0xff] 0.0
    %29 = vst [vmem:[#allocation2 + $0x38] sm:$0xff] 0.0
    %30 = vst [vmem:[#allocation2 + $0x40] sm:$0xff] 0.0
    %31 = vst [vmem:[#allocation2 + $0x48] sm:$0xff] 0.0
    %32 = vst [vmem:[#allocation2 + $0x50] sm:$0xff] 0.0
    %33 = vst [vmem:[#allocation2 + $0x58] sm:$0xff] 0.0
    %34 = vst [vmem:[#allocation2 + $0x60] sm:$0xff] 0.0
    %35 = vst [vmem:[#allocation2 + $0x68] sm:$0xff] 0.0
    %36 = vst [vmem:[#allocation2 + $0x70] sm:$0xff] 0.0
    %37 = vst [vmem:[#allocation2 + $0x78] sm:$0xff] 0.0
  $region21: #{_lambda_.5} parent=0 // pred_fallthru
    _
  %v38 = vld [vmem:[#allocation2] sm:$0xff]
  %v39 = vld [vmem:[#allocation2 + $0x8] sm:$0xff]
  %v40 = vld [vmem:[#allocation2 + $0x10] sm:$0xff]
  %v41 = vld [vmem:[#allocation2 + $0x18] sm:$0xff]
  %v42 = vld [vmem:[#allocation2 + $0x20] sm:$0xff]
  %v43 = vld [vmem:[#allocation2 + $0x28] sm:$0xff]
  %v44 = vld [vmem:[#allocation2 + $0x30] sm:$0xff]
  %v45 = vld [vmem:[#allocation2 + $0x38] sm:$0xff]
  %v46 = vld [vmem:[#allocation2 + $0x40] sm:$0xff]
  %v47 = vld [vmem:[#allocation2 + $0x48] sm:$0xff]
  %v48 = vld [vmem:[#allocation2 + $0x50] sm:$0xff]
  %v49 = vld [vmem:[#allocation2 + $0x58] sm:$0xff]
  %v50 = vld [vmem:[#allocation2 + $0x60] sm:$0xff]
  %v51 = vld [vmem:[#allocation2 + $0x68] sm:$0xff]
  %v52 = vld [vmem:[#allocation2 + $0x70] sm:$0xff]
  %v53 = vld [vmem:[#allocation2 + $0x78] sm:$0xff]
  %v54 = vld [vmem:[%s0] sm:$0xf]
  %v55 = vld [vmem:[%s0 + $0x4] sm:$0xf]
  %v56 = vld [vmem:[%s0 + $0x8] sm:$0xf]
  %v57 = vld [vmem:[%s0 + $0xc] sm:$0xf]
  %v58 = vld [vmem:[%s0 + $0x10] sm:$0xf]
  %v59 = vld [vmem:[%s0 + $0x14] sm:$0xf]
  %v60 = vld [vmem:[%s0 + $0x18] sm:$0xf]
  %v61 = vld [vmem:[%s0 + $0x1c] sm:$0xf]
  %v62 = vld [vmem:[%s0 + $0x20] sm:$0xf]
  %v63 = vld [vmem:[%s0 + $0x24] sm:$0xf]
  %v64 = vld [vmem:[%s0 + $0x28] sm:$0xf]
  %v65 = vld [vmem:[%s0 + $0x2c] sm:$0xf]
  %v66 = vld [vmem:[%s0 + $0x30] sm:$0xf]
  %v67 = vld [vmem:[%s0 + $0x34] sm:$0xf]
  %v68 = vld [vmem:[%s0 + $0x38] sm:$0xf]
  %v69 = vld [vmem:[%s0 + $0x3c] sm:$0xf]
  %v70 = vld [vmem:[%s1] sm:$0xf]
  %v71 = vld [vmem:[%s1 + $0x4] sm:$0xf]
  %v72 = vld [vmem:[%s1 + $0x8] sm:$0xf]
  %v73 = vld [vmem:[%s1 + $0xc] sm:$0xf]
  %v74 = vld [vmem:[%s1 + $0x10] sm:$0xf]
  %v75 = vld [vmem:[%s1 + $0x14] sm:$0xf]
  %v76 = vld [vmem:[%s1 + $0x18] sm:$0xf]
  %v77 = vld [vmem:[%s1 + $0x1c] sm:$0xf]
  %v78 = vld [vmem:[%s1 + $0x20] sm:$0xf]
  %v95 = vunpack.c.l.b16 %v54
  %v96 = vunpack.c.l.b16 %v55
  %v97 = vunpack.c.l.b16 %v56
  %v98 = vunpack.c.l.b16 %v57
  %v99 = vunpack.c.l.b16 %v58
  %v100 = vunpack.c.l.b16 %v59
  %v101 = vunpack.c.l.b16 %v60
  %v102 = vunpack.c.l.b16 %v61
  %v103 = vunpack.c.l.b16 %v62
  %v104 = vunpack.c.l.b16 %v63
  %v105 = vunpack.c.l.b16 %v64
  %v106 = vunpack.c.l.b16 %v65
  %v107 = vunpack.c.l.b16 %v66
  %v108 = vunpack.c.l.b16 %v67
  %v109 = vunpack.c.l.b16 %v68
  %v110 = vunpack.c.l.b16 %v69
  %v111 = vpack.c.b16 %v96, %v95
  %v112 = vpack.c.b16 %v98, %v97
  %v113 = vpack.c.b16 %v100, %v99
  %v114 = vpack.c.b16 %v102, %v101
  %v115 = vpack.c.b16 %v104, %v103
  %v116 = vpack.c.b16 %v106, %v105
  %v117 = vpack.c.b16 %v108, %v107
  %v118 = vpack.c.b16 %v110, %v109
  %v128 = vunpack.c.l.b16 %v70
  %v129 = vunpack.c.l.b16 %v71
  %v130 = vunpack.c.l.b16 %v72
  %v131 = vunpack.c.l.b16 %v73
  %v132 = vunpack.c.l.b16 %v74
  %v133 = vunpack.c.l.b16 %v75
  %v134 = vunpack.c.l.b16 %v76
  %v135 = vunpack.c.l.b16 %v77
  %v136 = vunpack.c.l.b16 %v78
  %v137 = vpack.c.b16 %v129, %v128
  %v138 = vpack.c.b16 %v131, %v130
  %v139 = vpack.c.b16 %v133, %v132
  %v140 = vpack.c.b16 %v135, %v134
  %v141 = vpack.c.b16 %v136, %v136
  %vm146 = vcmask 588800
  %v148 = vsel %vm146, %v111, 0
  %v151 = vsel %vm146, %v112, 0
  %v154 = vsel %vm146, %v113, 0
  %v157 = vsel %vm146, %v114, 0
  %v160 = vsel %vm146, %v115, 0
  %v163 = vsel %vm146, %v116, 0
  %v166 = vsel %vm146, %v117, 0
  %v169 = vsel %vm146, %v118, 0
  %vm171 = vcmask 1043456
  %v173 = vsel %vm171, %v141, 0
  %175 = vmatpush.bf16.msra.mxu0 0
  %176 = vmatpush.bf16.msra.mxu0 0
  %177 = vmatpush.bf16.msra.mxu0 0
  %178 = vmatpush.bf16.msra.mxu0 %v173
  %179 = vmatpush.bf16.msra.mxu0 %v140
  %180 = vmatpush.bf16.msra.mxu0 %v139
  %181 = vmatpush.bf16.msra.mxu0 %v138
  %182 = vmatpush.bf16.msra.mxu0 %v137
  %183 = vmatmul.bf16.gmra.mxu0 %v148
  %v184 = vpop.f32.mrf.mxu0
  %v185 = vadd.f32 0.0, %v184
  %v186 = vpop.f32.mrf.mxu0
  %v187 = vadd.f32 0.0, %v186
  %188 = vmatmul.bf16.gmra.mxu0 %v151
  %v189 = vpop.f32.mrf.mxu0
  %v190 = vadd.f32 0.0, %v189
  %v191 = vpop.f32.mrf.mxu0
  %v192 = vadd.f32 0.0, %v191
  %193 = vmatmul.bf16.gmra.mxu0 %v154
  %v194 = vpop.f32.mrf.mxu0
  %v195 = vadd.f32 0.0, %v194
  %v196 = vpop.f32.mrf.mxu0
  %v197 = vadd.f32 0.0, %v196
  %198 = vmatmul.bf16.gmra.mxu0 %v157
  %v199 = vpop.f32.mrf.mxu0
  %v200 = vadd.f32 0.0, %v199
  %v201 = vpop.f32.mrf.mxu0
  %v202 = vadd.f32 0.0, %v201
  %203 = vmatmul.bf16.gmra.mxu0 %v160
  %v204 = vpop.f32.mrf.mxu0
  %v205 = vadd.f32 0.0, %v204
  %v206 = vpop.f32.mrf.mxu0
  %v207 = vadd.f32 0.0, %v206
  %208 = vmatmul.bf16.gmra.mxu0 %v163
  %v209 = vpop.f32.mrf.mxu0
  %v210 = vadd.f32 0.0, %v209
  %v211 = vpop.f32.mrf.mxu0
  %v212 = vadd.f32 0.0, %v211
  %213 = vmatmul.bf16.gmra.mxu0 %v166
  %v214 = vpop.f32.mrf.mxu0
  %v215 = vadd.f32 0.0, %v214
  %v216 = vpop.f32.mrf.mxu0
  %v217 = vadd.f32 0.0, %v216
  %218 = vmatmul.bf16.gmra.mxu0 %v169
  %v219 = vpop.f32.mrf.mxu0
  %v220 = vadd.f32 0.0, %v219
  %v221 = vpop.f32.mrf.mxu0
  %v222 = vadd.f32 0.0, %v221
  %223 = vdwg.mxu0
  %v224 = vadd.f32 %v38, %v185
  %v225 = vadd.f32 %v39, %v187
  %v226 = vadd.f32 %v40, %v190
  %v227 = vadd.f32 %v41, %v192
  %v228 = vadd.f32 %v42, %v195
  %v229 = vadd.f32 %v43, %v197
  %v230 = vadd.f32 %v44, %v200
  %v231 = vadd.f32 %v45, %v202
  %v232 = vadd.f32 %v46, %v205
  %v233 = vadd.f32 %v47, %v207
  %v234 = vadd.f32 %v48, %v210
  %v235 = vadd.f32 %v49, %v212
  %v236 = vadd.f32 %v50, %v215
  %v237 = vadd.f32 %v51, %v217
  %v238 = vadd.f32 %v52, %v220
  %v239 = vadd.f32 %v53, %v222
  %240 = vst [vmem:[#allocation2] sm:$0xff] %v224
  %241 = vst [vmem:[#allocation2 + $0x8] sm:$0xff] %v225
  %242 = vst [vmem:[#allocation2 + $0x10] sm:$0xff] %v226
  %243 = vst [vmem:[#allocation2 + $0x18] sm:$0xff] %v227
  %244 = vst [vmem:[#allocation2 + $0x20] sm:$0xff] %v228
  %245 = vst [vmem:[#allocation2 + $0x28] sm:$0xff] %v229
  %246 = vst [vmem:[#allocation2 + $0x30] sm:$0xff] %v230
  %247 = vst [vmem:[#allocation2 + $0x38] sm:$0xff] %v231
  %248 = vst [vmem:[#allocation2 + $0x40] sm:$0xff] %v232
  %249 = vst [vmem:[#allocation2 + $0x48] sm:$0xff] %v233
  %250 = vst [vmem:[#allocation2 + $0x50] sm:$0xff] %v234
  %251 = vst [vmem:[#allocation2 + $0x58] sm:$0xff] %v235
  %252 = vst [vmem:[#allocation2 + $0x60] sm:$0xff] %v236
  %253 = vst [vmem:[#allocation2 + $0x68] sm:$0xff] %v237
  %254 = vst [vmem:[#allocation2 + $0x70] sm:$0xff] %v238
  %255 = vst [vmem:[#allocation2 + $0x78] sm:$0xff] %v239
  // Predicated region
  $region22: #{_lambda_.5} parent=0 // pred_check
    %p256 = pneg %p18
  $region23: #{_lambda_.5} parent=0 // pred_check_branch
    %258 = sbr.rel (%p256) target = $region25
  $region24: #{_lambda_.5} parent=0 // pred_region
    %v259 = vld [vmem:[#allocation2] sm:$0xff]
    %v260 = vld [vmem:[#allocation2 + $0x8] sm:$0xff]
    %v261 = vld [vmem:[#allocation2 + $0x10] sm:$0xff]
    %v262 = vld [vmem:[#allocation2 + $0x18] sm:$0xff]
    %v263 = vld [vmem:[#allocation2 + $0x20] sm:$0xff]
    %v264 = vld [vmem:[#allocation2 + $0x28] sm:$0xff]
    %v265 = vld [vmem:[#allocation2 + $0x30] sm:$0xff]
    %v266 = vld [vmem:[#allocation2 + $0x38] sm:$0xff]
    %v267 = vld [vmem:[#allocation2 + $0x40] sm:$0xff]
    %v268 = vld [vmem:[#allocation2 + $0x48] sm:$0xff]
    %v269 = vld [vmem:[#allocation2 + $0x50] sm:$0xff]
    %v270 = vld [vmem:[#allocation2 + $0x58] sm:$0xff]
    %v271 = vld [vmem:[#allocation2 + $0x60] sm:$0xff]
    %v272 = vld [vmem:[#allocation2 + $0x68] sm:$0xff]
    %v273 = vld [vmem:[#allocation2 + $0x70] sm:$0xff]
    %v274 = vld [vmem:[#allocation2 + $0x78] sm:$0xff]
    %v275 = vld [vmem:[%s2] sm:$0x1]
    %v277 = vperm.slane %v275, 0
    %v279 = vmul.f32 %v259, %v277
    %v280 = vmul.f32 %v260, %v277
    %v281 = vmul.f32 %v261, %v277
    %v282 = vmul.f32 %v262, %v277
    %v283 = vmul.f32 %v263, %v277
    %v284 = vmul.f32 %v264, %v277
    %v285 = vmul.f32 %v265, %v277
    %v286 = vmul.f32 %v266, %v277
    %v287 = vmul.f32 %v267, %v277
    %v288 = vmul.f32 %v268, %v277
    %v289 = vmul.f32 %v269, %v277
    %v290 = vmul.f32 %v270, %v277
    %v291 = vmul.f32 %v271, %v277
    %v292 = vmul.f32 %v272, %v277
    %v293 = vmul.f32 %v273, %v277
    %v294 = vmul.f32 %v274, %v277
    %v295 = vld [vmem:[%s3] sm:$0x1]
    %v297 = vperm.slane %v295, 0
    %v299 = vadd.f32 %v279, %v297
    %v300 = vadd.f32 %v280, %v297
    %v301 = vadd.f32 %v281, %v297
    %v302 = vadd.f32 %v282, %v297
    %v303 = vadd.f32 %v283, %v297
    %v304 = vadd.f32 %v284, %v297
    %v305 = vadd.f32 %v285, %v297
    %v306 = vadd.f32 %v286, %v297
    %v307 = vadd.f32 %v287, %v297
    %v308 = vadd.f32 %v288, %v297
    %v309 = vadd.f32 %v289, %v297
    %v310 = vadd.f32 %v290, %v297
    %v311 = vadd.f32 %v291, %v297
    %v312 = vadd.f32 %v292, %v297
    %v313 = vadd.f32 %v293, %v297
    %v314 = vadd.f32 %v294, %v297
    %v315 = vmax.f32 %v299, 0.0
    %v316 = vmax.f32 %v300, 0.0
    %v317 = vmax.f32 %v301, 0.0
    %v318 = vmax.f32 %v302, 0.0
    %v319 = vmax.f32 %v303, 0.0
    %v320 = vmax.f32 %v304, 0.0
    %v321 = vmax.f32 %v305, 0.0
    %v322 = vmax.f32 %v306, 0.0
    %v323 = vmax.f32 %v307, 0.0
    %v324 = vmax.f32 %v308, 0.0
    %v325 = vmax.f32 %v309, 0.0
    %v326 = vmax.f32 %v310, 0.0
    %v327 = vmax.f32 %v311, 0.0
    %v328 = vmax.f32 %v312, 0.0
    %v329 = vmax.f32 %v313, 0.0
    %v330 = vmax.f32 %v314, 0.0
    %v331 = vpack.c.bf16 %v315, %v315
    %v332 = vpack.c.bf16 %v316, %v316
    %v333 = vpack.c.bf16 %v317, %v317
    %v334 = vpack.c.bf16 %v318, %v318
    %v335 = vpack.c.bf16 %v319, %v319
    %v336 = vpack.c.bf16 %v320, %v320
    %v337 = vpack.c.bf16 %v321, %v321
    %v338 = vpack.c.bf16 %v322, %v322
    %v339 = vpack.c.bf16 %v323, %v323
    %v340 = vpack.c.bf16 %v324, %v324
    %v341 = vpack.c.bf16 %v325, %v325
    %v342 = vpack.c.bf16 %v326, %v326
    %v343 = vpack.c.bf16 %v327, %v327
    %v344 = vpack.c.bf16 %v328, %v328
    %v345 = vpack.c.bf16 %v329, %v329
    %v346 = vpack.c.bf16 %v330, %v330
    %347 = vst [vmem:[%s4] sm:$0xf] %v331
    %348 = vst [vmem:[%s4 + $0x4] sm:$0xf] %v332
    %349 = vst [vmem:[%s4 + $0x8] sm:$0xf] %v333
    %350 = vst [vmem:[%s4 + $0xc] sm:$0xf] %v334
    %351 = vst [vmem:[%s4 + $0x10] sm:$0xf] %v335
    %352 = vst [vmem:[%s4 + $0x14] sm:$0xf] %v336
    %353 = vst [vmem:[%s4 + $0x18] sm:$0xf] %v337
    %354 = vst [vmem:[%s4 + $0x1c] sm:$0xf] %v338
    %355 = vst [vmem:[%s4 + $0x20] sm:$0xf] %v339
    %356 = vst [vmem:[%s4 + $0x24] sm:$0xf] %v340
    %357 = vst [vmem:[%s4 + $0x28] sm:$0xf] %v341
    %358 = vst [vmem:[%s4 + $0x2c] sm:$0xf] %v342
    %359 = vst [vmem:[%s4 + $0x30] sm:$0xf] %v343
    %360 = vst [vmem:[%s4 + $0x34] sm:$0xf] %v344
    %361 = vst [vmem:[%s4 + $0x38] sm:$0xf] %v345
    %362 = vst [vmem:[%s4 + $0x3c] sm:$0xf] %v346
  $region25: #{_lambda_.5} parent=0 // pred_fallthru
    _
  // Predicated region
  $region26: #{_lambda_.5} parent=0 // pred_check
    _
  $region27: #{_lambda_.5} parent=0 // pred_check_branch
    %364 = sbr.rel (0) target = $region29
  $region28: #{_lambda_.5} parent=0 // pred_region
    _
  $region29: #{_lambda_.5} parent=0 // pred_fallthru
    _
  // Predicated region
  $region30: #{_lambda_.5} parent=0 // pred_check
    _
  $region31: #{_lambda_.5} parent=0 // pred_check_branch
    %366 = sbr.rel (0) target = $region33
  $region32: #{_lambda_.5} parent=0 // pred_region
    _
  $region33: #{_lambda_.5} parent=0 // pred_fallthru
    _

// kernel: _lambda_.4
$region0: #{_lambda_.4}
  #allocation0 [shape = 'u32[]', space=smem, size = 0x4, offset = 0x4, fixed_abs, tag = 'smem constant byte address 0x4 - core index']
  #allocation1 [shape = 'u32[72,128]{1,0:T(1,128)}', space=vmem, size = 0x9000, scoped, tag = 'internal scratch']
  #allocation2 [shape = 'f32[256,128]{1,0:T(8,128)}', space=vmem, size = 0x20000, scoped, tag = 'scratch operand']
  %s0 = inlined_call_operand.vmem [shape: f32[512,4], index: 0, kind: input, shape index: {}]
  %s1 = inlined_call_operand.vmem [shape: bf16[4,128], index: 1, kind: input, shape index: {}]
  %s2 = inlined_call_operand.vmem [shape: f32[1,128], index: 2, kind: input, shape index: {}]
  %s3 = inlined_call_operand.vmem [shape: f32[1,128], index: 3, kind: input, shape index: {}]
  %s4 = inlined_call_operand.vmem [shape: bf16[512,128], index: 4, kind: output, shape index: {}]
  %s5 = sld [smem:[#allocation0]]
  $region57: #{_lambda_.4} parent=0
    _
  %s7 = ssub.s32 1, %s5
  %s8 = scalar_select 0, %s7, %s5
  loop: start=0, step=1, limit=4
  $region2: #{_lambda_.4} parent=0 // loop_pre_header
    _
  $region3: #{_lambda_.4} parent=0 // loop_header
    %s10 = sphi 0, %s14
    %p11 = scmp.ge.s32.totalorder %s10, 4
    %s17 = sphi 0, %s36
    %s18 = sphi 0, %s32
    %s19 = sphi 0, %s28
    %s20 = sphi 0, %s17
    %s21 = sphi 0, %s18
    %s22 = sphi 0, %s19
    %s23 = sphi 0, %s20
    %s24 = sphi 0, %s21
    %s25 = sphi 0, %s22
    %s41 = sphi 0, %s43
    %s44 = sphi 0, %s41
    %s45 = sphi 0, %s44
    %s61 = sphi 0, %s45
    %s69 = sphi 0, %s71
    %s72 = sphi 0, %s69
    %s73 = sphi 0, %s72
    %s89 = sphi 0, %s73
    %s95 = sphi 0, %s97
    %s98 = sphi 0, %s95
    %s99 = sphi 0, %s98
    %s115 = sphi 0, %s99
    %s121 = sphi 0, %s123
    %s124 = sphi 0, %s121
    %s125 = sphi 0, %s124
    %s141 = sphi 0, %s125
    %s149 = sphi 0, %s151
    %s152 = sphi 0, %s149
    %s153 = sphi 0, %s152
    %s169 = sphi 0, %s153
  $region4: #{_lambda_.4} parent=0 // loop_header_branch
    %13 = sbr.rel (%p11) target = $region8
  $region5: #{_lambda_.4} parent=0 // loop_body
    %s15 = ssub.s32 %s10, 1
    %s16 = ssub.s32 %s10, 2
    %s26 = sadd.s32 1, %s19
    %p27 = scmp.ge.s32.totalorder %s26, 1
    %s28 = scalar_select %p27, 0, %s26
    %s29 = sadd.s32 1, %s18
    %s30 = scalar_select %p27, %s29, %s18
    %p31 = scmp.ge.s32.totalorder %s30, 1
    %s32 = scalar_select %p31, 0, %s30
    %s33 = sadd.s32 1, %s17
    %s34 = scalar_select %p31, %s33, %s17
    %p35 = scmp.ge.s32.totalorder %s34, 2
    %s36 = scalar_select %p35, 0, %s34
    %s37 = ssub.s32 %s17, %s36
    %s38 = ssub.s32 %s19, %s28
    %s39 = sor.u32 %s37, %s38
    %p40 = scmp.eq.s32.totalorder %s39, 0
    %s42 = sadd.s32 %s41, 1
    %s43 = scalar_select %p40, %s41, %s42
    %p46 = pneg %p40
    %p47 = scmp.eq.s32.totalorder %s10, 1
    %p48 = por %p46, %p47
    %p49 = scmp.ne.s32.totalorder %s41, %s44
    %p50 = scmp.eq.s32.totalorder %s10, 0
    %p51 = por %p49, %p50
    %p52 = scmp.ne.s32.totalorder %s41, %s44
    %p53 = scmp.eq.s32.totalorder %s15, 1
    %p54 = por %p52, %p53
    %p55 = scmp.ne.s32.totalorder %s44, %s45
    %p56 = scmp.eq.s32.totalorder %s15, 0
    %p57 = por %p55, %p56
    %p58 = scmp.ne.s32.totalorder %s44, %s45
    %p59 = scmp.eq.s32.totalorder %s16, 1
    %p60 = por %p58, %p59
    %p62 = scmp.ne.s32.totalorder %s45, %s61
    %p63 = scmp.eq.s32.totalorder %s16, 0
    %p64 = por %p62, %p63
    %s65 = ssub.s32 %s19, %s28
    %s66 = ssub.s32 %s18, %s32
    %s67 = sor.u32 %s65, %s66
    %p68 = scmp.eq.s32.totalorder %s67, 0
    %s70 = sadd.s32 %s69, 1
    %s71 = scalar_select %p68, %s69, %s70
    %p74 = pneg %p68
    %p75 = scmp.eq.s32.totalorder %s10, 1
    %p76 = por %p74, %p75
    %p77 = scmp.ne.s32.totalorder %s69, %s72
    %p78 = scmp.eq.s32.totalorder %s10, 0
    %p79 = por %p77, %p78
    %p80 = scmp.ne.s32.totalorder %s69, %s72
    %p81 = scmp.eq.s32.totalorder %s15, 1
    %p82 = por %p80, %p81
    %p83 = scmp.ne.s32.totalorder %s72, %s73
    %p84 = scmp.eq.s32.totalorder %s15, 0
    %p85 = por %p83, %p84
    %p86 = scmp.ne.s32.totalorder %s72, %s73
    %p87 = scmp.eq.s32.totalorder %s16, 1
    %p88 = por %p86, %p87
    %p90 = scmp.ne.s32.totalorder %s73, %s89
    %p91 = scmp.eq.s32.totalorder %s16, 0
    %p92 = por %p90, %p91
    %s93 = ssub.s32 %s18, %s32
    %p94 = scmp.eq.s32.totalorder %s93, 0
    %s96 = sadd.s32 %s95, 1
    %s97 = scalar_select %p94, %s95, %s96
    %p100 = pneg %p94
    %p101 = scmp.eq.s32.totalorder %s10, 1
    %p102 = por %p100, %p101
    %p103 = scmp.ne.s32.totalorder %s95, %s98
    %p104 = scmp.eq.s32.totalorder %s10, 0
    %p105 = por %p103, %p104
    %p106 = scmp.ne.s32.totalorder %s95, %s98
    %p107 = scmp.eq.s32.totalorder %s15, 1
    %p108 = por %p106, %p107
    %p109 = scmp.ne.s32.totalorder %s98, %s99
    %p110 = scmp.eq.s32.totalorder %s15, 0
    %p111 = por %p109, %p110
    %p112 = scmp.ne.s32.totalorder %s98, %s99
    %p113 = scmp.eq.s32.totalorder %s16, 1
    %p114 = por %p112, %p113
    %p116 = scmp.ne.s32.totalorder %s99, %s115
    %p117 = scmp.eq.s32.totalorder %s16, 0
    %p118 = por %p116, %p117
    %s119 = ssub.s32 %s18, %s32
    %p120 = scmp.eq.s32.totalorder %s119, 0
    %s122 = sadd.s32 %s121, 1
    %s123 = scalar_select %p120, %s121, %s122
    %p126 = pneg %p120
    %p127 = scmp.eq.s32.totalorder %s10, 1
    %p128 = por %p126, %p127
    %p129 = scmp.ne.s32.totalorder %s121, %s124
    %p130 = scmp.eq.s32.totalorder %s10, 0
    %p131 = por %p129, %p130
    %p132 = scmp.ne.s32.totalorder %s121, %s124
    %p133 = scmp.eq.s32.totalorder %s15, 1
    %p134 = por %p132, %p133
    %p135 = scmp.ne.s32.totalorder %s124, %s125
    %p136 = scmp.eq.s32.totalorder %s15, 0
    %p137 = por %p135, %p136
    %p138 = scmp.ne.s32.totalorder %s124, %s125
    %p139 = scmp.eq.s32.totalorder %s16, 1
    %p140 = por %p138, %p139
    %p142 = scmp.ne.s32.totalorder %s125, %s141
    %p143 = scmp.eq.s32.totalorder %s16, 0
    %p144 = por %p142, %p143
    %s145 = ssub.s32 %s17, %s36
    %s146 = ssub.s32 %s18, %s32
    %s147 = sor.u32 %s145, %s146
    %p148 = scmp.eq.s32.totalorder %s147, 0
    %s150 = sadd.s32 %s149, 1
    %s151 = scalar_select %p148, %s149, %s150
    %p154 = pneg %p148
    %p155 = scmp.eq.s32.totalorder %s10, 1
    %p156 = por %p154, %p155
    %p157 = scmp.ne.s32.totalorder %s149, %s152
    %p158 = scmp.eq.s32.totalorder %s10, 0
    %p159 = por %p157, %p158
    %p160 = scmp.ne.s32.totalorder %s149, %s152
    %p161 = scmp.eq.s32.totalorder %s15, 1
    %p162 = por %p160, %p161
    %p163 = scmp.ne.s32.totalorder %s152, %s153
    %p164 = scmp.eq.s32.totalorder %s15, 0
    %p165 = por %p163, %p164
    %p166 = scmp.ne.s32.totalorder %s152, %s153
    %p167 = scmp.eq.s32.totalorder %s16, 1
    %p168 = por %p166, %p167
    %p170 = scmp.ne.s32.totalorder %s153, %s169
    %p171 = scmp.eq.s32.totalorder %s16, 0
    %p172 = por %p170, %p171
    %p173 = scmp.le.s32.totalorder 1, %s10
    %p174 = scmp.lt.s32.totalorder %s10, 3
    %p175 = pnand %p173, %p174
    %p176 = pneg %p175
    // Predicated region
    $region9: #{_lambda_.4} parent=5 // pred_check
      _
    $region10: #{_lambda_.4} parent=5 // pred_check_branch
      %178 = sbr.rel (%p175) target = $region12
    $region11: #{_lambda_.4} parent=5 // pred_region
      %s179 = ssub.s32 %s10, 1
      // Predicated region
      $region13: #{_lambda_.4} parent=11 // pred_check
        %p180 = pneg %p85
      $region14: #{_lambda_.4} parent=11 // pred_check_branch
        %182 = sbr.rel (%p180) target = $region16
      $region15: #{_lambda_.4} parent=11 // pred_region
        %p183 = scmp.lt.s32.totalorder %s22, 0
        %s184 = scalar_select %p183, %s22, 0
        %p185 = scmp.lt.s32.totalorder %s21, 0
        %s186 = scalar_select %p185, %s21, 0
        %s187 = sadd.s32 %s186, %s184
        %s188 = smul.addr %s187, 2
        %s189 = scalar_lea.vmem %s1, %s188
      $region16: #{_lambda_.4} parent=11 // pred_fallthru
        _
      // Predicated region
      $region17: #{_lambda_.4} parent=11 // pred_check
        %p190 = pneg %p111
      $region18: #{_lambda_.4} parent=11 // pred_check_branch
        %192 = sbr.rel (%p190) target = $region20
      $region19: #{_lambda_.4} parent=11 // pred_region
        %p193 = scmp.lt.s32.totalorder %s21, 0
        %s194 = scalar_select %p193, %s21, 0
        %s195 = scalar_lea.vmem %s2, %s194
      $region20: #{_lambda_.4} parent=11 // pred_fallthru
        _
      // Predicated region
      $region21: #{_lambda_.4} parent=11 // pred_check
        %p196 = pneg %p137
      $region22: #{_lambda_.4} parent=11 // pred_check_branch
        %198 = sbr.rel (%p196) target = $region24
      $region23: #{_lambda_.4} parent=11 // pred_region
        %p199 = scmp.lt.s32.totalorder %s21, 0
        %s200 = scalar_select %p199, %s21, 0
        %s201 = scalar_lea.vmem %s3, %s200
      $region24: #{_lambda_.4} parent=11 // pred_fallthru
        _
    $region12: #{_lambda_.4} parent=5 // pred_fallthru
      _
    %p202 = scmp.lt.s32.totalorder %s10, 2
    // Predicated region
    $region25: #{_lambda_.4} parent=5 // pred_check
      %p203 = pneg %p202
    $region26: #{_lambda_.4} parent=5 // pred_check_branch
      %205 = sbr.rel (%p203) target = $region28
    $region27: #{_lambda_.4} parent=5 // pred_region
      // Predicated region
      $region29: #{_lambda_.4} parent=27 // pred_check
        %p206 = pneg %p51
      $region30: #{_lambda_.4} parent=27 // pred_check_branch
        %208 = sbr.rel (%p206) target = $region32
      $region31: #{_lambda_.4} parent=27 // pred_region
        %s209 = smul.u32 32, %s17
        %p210 = scmp.lt.s32.totalorder %s209, 63
        %s211 = scalar_select %p210, %s209, 63
        %p212 = scmp.lt.s32.totalorder %s19, 0
        %s213 = scalar_select %p212, %s19, 0
        %s214 = sadd.s32 %s213, %s211
        %s215 = smul.addr %s214, 8
        %s216 = scalar_lea.vmem %s0, %s215
        %s217 = smul.u32 32, %s17
      $region32: #{_lambda_.4} parent=27 // pred_fallthru
        _
    $region28: #{_lambda_.4} parent=5 // pred_fallthru
      _
    %p218 = scmp.le.s32.totalorder 1, %s10
    %p219 = scmp.lt.s32.totalorder %s10, 3
    %p220 = pnand %p218, %p219
    %p221 = pneg %p220
    // Predicated region
    $region33: #{_lambda_.4} parent=5 // pred_check
      _
    $region34: #{_lambda_.4} parent=5 // pred_check_branch
      %223 = sbr.rel (%p220) target = $region36
    $region35: #{_lambda_.4} parent=5 // pred_region
      %s224 = ssub.s32 %s10, 1
      %s225 = smul.u32 32, %s20
      %p226 = scmp.lt.s32.totalorder %s225, 63
      %s227 = scalar_select %p226, %s225, 63
      %p228 = scmp.lt.s32.totalorder %s22, 0
      %s229 = scalar_select %p228, %s22, 0
      %s230 = sadd.s32 %s229, %s227
      %s231 = smul.addr %s230, 8
      %s232 = scalar_lea.vmem %s0, %s231
      %p233 = pneg %p57
      %p234 = pneg %p54
      %p235 = scmp.lt.s32.totalorder %s22, 0
      %s236 = scalar_select %p235, %s22, 0
      %p237 = scmp.lt.s32.totalorder %s21, 0
      %s238 = scalar_select %p237, %s21, 0
      %s239 = sadd.s32 %s238, %s236
      %s240 = smul.addr %s239, 2
      %s241 = scalar_lea.vmem %s1, %s240
      %p242 = pneg %p85
      %p243 = pneg %p82
      %p244 = scmp.lt.s32.totalorder %s21, 0
      %s245 = scalar_select %p244, %s21, 0
      %s246 = scalar_lea.vmem %s2, %s245
      %p247 = pneg %p111
      %p248 = pneg %p108
      %p249 = scmp.lt.s32.totalorder %s21, 0
      %s250 = scalar_select %p249, %s21, 0
      %s251 = scalar_lea.vmem %s3, %s250
      %p252 = pneg %p137
      %p253 = pneg %p134
      %p254 = pneg %p165
      %p255 = pneg %p162
      %s256 = smul.u32 32, %s20
      %p257 = scmp.lt.s32.totalorder %s256, 63
      %s258 = scalar_select %p257, %s256, 63
      %p259 = scmp.lt.s32.totalorder %s21, 0
      %s260 = scalar_select %p259, %s21, 0
      %s261 = sadd.s32 %s260, %s258
      %s262 = smul.addr %s261, 4
      %s263 = scalar_lea.vmem %s4, %s262
      %s264 = smul.u32 32, %s20
      %p265 = scmp.lt.s32.totalorder %s264, 63
      %s266 = scalar_select %p265, %s264, 63
      %p267 = scmp.lt.s32.totalorder %s22, 0
      %s268 = scalar_select %p267, %s22, 0
      %s269 = sadd.s32 %s268, %s266
      %s270 = smul.addr %s269, 8
      %s271 = scalar_lea.vmem %s0, %s270
      %s272 = smul.u32 32, %s20
      %p273 = scmp.lt.s32.totalorder %s22, 0
      %s274 = scalar_select %p273, %s22, 0
      %p275 = scmp.lt.s32.totalorder %s21, 0
      %s276 = scalar_select %p275, %s21, 0
      %s277 = sadd.s32 %s276, %s274
      %s278 = smul.addr %s277, 2
      %s279 = scalar_lea.vmem %s1, %s278
      %p280 = scmp.lt.s32.totalorder %s21, 0
      %s281 = scalar_select %p280, %s21, 0
      %s282 = scalar_lea.vmem %s2, %s281
      %p283 = scmp.lt.s32.totalorder %s21, 0
      %s284 = scalar_select %p283, %s21, 0
      %s285 = scalar_lea.vmem %s3, %s284
      %s286 = smul.u32 32, %s20
      %p287 = scmp.lt.s32.totalorder %s286, 63
      %s288 = scalar_select %p287, %s286, 63
      %p289 = scmp.lt.s32.totalorder %s21, 0
      %s290 = scalar_select %p289, %s21, 0
      %s291 = sadd.s32 %s290, %s288
      %s292 = smul.addr %s291, 4
      %s293 = scalar_lea.vmem %s4, %s292
      %s294 = smul.u32 32, %s20
      %p296 = scmp.eq.s32.totalorder %s22, 0
      // Predicated region
      $region37: #{_lambda_.4} parent=35 // pred_check
        %p297 = pneg %p296
      $region38: #{_lambda_.4} parent=35 // pred_check_branch
        %299 = sbr.rel (%p297) target = $region40
      $region39: #{_lambda_.4} parent=35 // pred_region
        %300 = vst [vmem:[#allocation2] sm:$0xff] 0.0
        %301 = vst [vmem:[#allocation2 + $0x8] sm:$0xff] 0.0
        %302 = vst [vmem:[#allocation2 + $0x10] sm:$0xff] 0.0
        %303 = vst [vmem:[#allocation2 + $0x18] sm:$0xff] 0.0
        %304 = vst [vmem:[#allocation2 + $0x20] sm:$0xff] 0.0
        %305 = vst [vmem:[#allocation2 + $0x28] sm:$0xff] 0.0
        %306 = vst [vmem:[#allocation2 + $0x30] sm:$0xff] 0.0
        %307 = vst [vmem:[#allocation2 + $0x38] sm:$0xff] 0.0
        %308 = vst [vmem:[#allocation2 + $0x40] sm:$0xff] 0.0
        %309 = vst [vmem:[#allocation2 + $0x48] sm:$0xff] 0.0
        %310 = vst [vmem:[#allocation2 + $0x50] sm:$0xff] 0.0
        %311 = vst [vmem:[#allocation2 + $0x58] sm:$0xff] 0.0
        %312 = vst [vmem:[#allocation2 + $0x60] sm:$0xff] 0.0
        %313 = vst [vmem:[#allocation2 + $0x68] sm:$0xff] 0.0
        %314 = vst [vmem:[#allocation2 + $0x70] sm:$0xff] 0.0
        %315 = vst [vmem:[#allocation2 + $0x78] sm:$0xff] 0.0
        %316 = vst [vmem:[#allocation2 + $0x80] sm:$0xff] 0.0
        %317 = vst [vmem:[#allocation2 + $0x88] sm:$0xff] 0.0
        %318 = vst [vmem:[#allocation2 + $0x90] sm:$0xff] 0.0
        %319 = vst [vmem:[#allocation2 + $0x98] sm:$0xff] 0.0
        %320 = vst [vmem:[#allocation2 + $0xa0] sm:$0xff] 0.0
        %321 = vst [vmem:[#allocation2 + $0xa8] sm:$0xff] 0.0
        %322 = vst [vmem:[#allocation2 + $0xb0] sm:$0xff] 0.0
        %323 = vst [vmem:[#allocation2 + $0xb8] sm:$0xff] 0.0
        %324 = vst [vmem:[#allocation2 + $0xc0] sm:$0xff] 0.0
        %325 = vst [vmem:[#allocation2 + $0xc8] sm:$0xff] 0.0
        %326 = vst [vmem:[#allocation2 + $0xd0] sm:$0xff] 0.0
        %327 = vst [vmem:[#allocation2 + $0xd8] sm:$0xff] 0.0
        %328 = vst [vmem:[#allocation2 + $0xe0] sm:$0xff] 0.0
        %329 = vst [vmem:[#allocation2 + $0xe8] sm:$0xff] 0.0
        %330 = vst [vmem:[#allocation2 + $0xf0] sm:$0xff] 0.0
        %331 = vst [vmem:[#allocation2 + $0xf8] sm:$0xff] 0.0
      $region40: #{_lambda_.4} parent=35 // pred_fallthru
        _
      %v332 = vld [vmem:[#allocation2] sm:$0xff]
      %v333 = vld [vmem:[#allocation2 + $0x8] sm:$0xff]
      %v334 = vld [vmem:[#allocation2 + $0x10] sm:$0xff]
      %v335 = vld [vmem:[#allocation2 + $0x18] sm:$0xff]
      %v336 = vld [vmem:[#allocation2 + $0x20] sm:$0xff]
      %v337 = vld [vmem:[#allocation2 + $0x28] sm:$0xff]
      %v338 = vld [vmem:[#allocation2 + $0x30] sm:$0xff]
      %v339 = vld [vmem:[#allocation2 + $0x38] sm:$0xff]
      %v340 = vld [vmem:[#allocation2 + $0x40] sm:$0xff]
      %v341 = vld [vmem:[#allocation2 + $0x48] sm:$0xff]
      %v342 = vld [vmem:[#allocation2 + $0x50] sm:$0xff]
      %v343 = vld [vmem:[#allocation2 + $0x58] sm:$0xff]
      %v344 = vld [vmem:[#allocation2 + $0x60] sm:$0xff]
      %v345 = vld [vmem:[#allocation2 + $0x68] sm:$0xff]
      %v346 = vld [vmem:[#allocation2 + $0x70] sm:$0xff]
      %v347 = vld [vmem:[#allocation2 + $0x78] sm:$0xff]
      %v348 = vld [vmem:[#allocation2 + $0x80] sm:$0xff]
      %v349 = vld [vmem:[#allocation2 + $0x88] sm:$0xff]
      %v350 = vld [vmem:[#allocation2 + $0x90] sm:$0xff]
      %v351 = vld [vmem:[#allocation2 + $0x98] sm:$0xff]
      %v352 = vld [vmem:[#allocation2 + $0xa0] sm:$0xff]
      %v353 = vld [vmem:[#allocation2 + $0xa8] sm:$0xff]
      %v354 = vld [vmem:[#allocation2 + $0xb0] sm:$0xff]
      %v355 = vld [vmem:[#allocation2 + $0xb8] sm:$0xff]
      %v356 = vld [vmem:[#allocation2 + $0xc0] sm:$0xff]
      %v357 = vld [vmem:[#allocation2 + $0xc8] sm:$0xff]
      %v358 = vld [vmem:[#allocation2 + $0xd0] sm:$0xff]
      %v359 = vld [vmem:[#allocation2 + $0xd8] sm:$0xff]
      %v360 = vld [vmem:[#allocation2 + $0xe0] sm:$0xff]
      %v361 = vld [vmem:[#allocation2 + $0xe8] sm:$0xff]
      %v362 = vld [vmem:[#allocation2 + $0xf0] sm:$0xff]
      %v363 = vld [vmem:[#allocation2 + $0xf8] sm:$0xff]
      %v364 = vld [vmem:[%s271] sm:$0xff]
      %v365 = vld [vmem:[%s271 + $0x8] sm:$0xff]
      %v366 = vld [vmem:[%s271 + $0x10] sm:$0xff]
      %v367 = vld [vmem:[%s271 + $0x18] sm:$0xff]
      %v368 = vld [vmem:[%s271 + $0x20] sm:$0xff]
      %v369 = vld [vmem:[%s271 + $0x28] sm:$0xff]
      %v370 = vld [vmem:[%s271 + $0x30] sm:$0xff]
      %v371 = vld [vmem:[%s271 + $0x38] sm:$0xff]
      %v372 = vld [vmem:[%s271 + $0x40] sm:$0xff]
      %v373 = vld [vmem:[%s271 + $0x48] sm:$0xff]
      %v374 = vld [vmem:[%s271 + $0x50] sm:$0xff]
      %v375 = vld [vmem:[%s271 + $0x58] sm:$0xff]
      %v376 = vld [vmem:[%s271 + $0x60] sm:$0xff]
      %v377 = vld [vmem:[%s271 + $0x68] sm:$0xff]
      %v378 = vld [vmem:[%s271 + $0x70] sm:$0xff]
      %v379 = vld [vmem:[%s271 + $0x78] sm:$0xff]
      %v380 = vld [vmem:[%s271 + $0x80] sm:$0xff]
      %v381 = vld [vmem:[%s271 + $0x88] sm:$0xff]
      %v382 = vld [vmem:[%s271 + $0x90] sm:$0xff]
      %v383 = vld [vmem:[%s271 + $0x98] sm:$0xff]
      %v384 = vld [vmem:[%s271 + $0xa0] sm:$0xff]
      %v385 = vld [vmem:[%s271 + $0xa8] sm:$0xff]
      %v386 = vld [vmem:[%s271 + $0xb0] sm:$0xff]
      %v387 = vld [vmem:[%s271 + $0xb8] sm:$0xff]
      %v388 = vld [vmem:[%s271 + $0xc0] sm:$0xff]
      %v389 = vld [vmem:[%s271 + $0xc8] sm:$0xff]
      %v390 = vld [vmem:[%s271 + $0xd0] sm:$0xff]
      %v391 = vld [vmem:[%s271 + $0xd8] sm:$0xff]
      %v392 = vld [vmem:[%s271 + $0xe0] sm:$0xff]
      %v393 = vld [vmem:[%s271 + $0xe8] sm:$0xff]
      %v394 = vld [vmem:[%s271 + $0xf0] sm:$0xff]
      %v395 = vld [vmem:[%s271 + $0xf8] sm:$0xff]
      %v396 = vpack.c.bf16 %v365, %v364
      %v397 = vpack.c.bf16 %v367, %v366
      %v398 = vpack.c.bf16 %v369, %v368
      %v399 = vpack.c.bf16 %v371, %v370
      %v400 = vpack.c.bf16 %v373, %v372
      %v401 = vpack.c.bf16 %v375, %v374
      %v402 = vpack.c.bf16 %v377, %v376
      %v403 = vpack.c.bf16 %v379, %v378
      %v404 = vpack.c.bf16 %v381, %v380
      %v405 = vpack.c.bf16 %v383, %v382
      %v406 = vpack.c.bf16 %v385, %v384
      %v407 = vpack.c.bf16 %v387, %v386
      %v408 = vpack.c.bf16 %v389, %v388
      %v409 = vpack.c.bf16 %v391, %v390
      %v410 = vpack.c.bf16 %v393, %v392
      %v411 = vpack.c.bf16 %v395, %v394
      %v412 = vld [vmem:[%s279] sm:$0x3]
      %vm413 = vcmask 31744
      %v415 = vsel %vm413, %v396, 0
      %v418 = vsel %vm413, %v397, 0
      %v421 = vsel %vm413, %v398, 0
      %v424 = vsel %vm413, %v399, 0
      %v427 = vsel %vm413, %v400, 0
      %v430 = vsel %vm413, %v401, 0
      %v433 = vsel %vm413, %v402, 0
      %v436 = vsel %vm413, %v403, 0
      %v439 = vsel %vm413, %v404, 0
      %v442 = vsel %vm413, %v405, 0
      %v445 = vsel %vm413, %v406, 0
      %v448 = vsel %vm413, %v407, 0
      %v451 = vsel %vm413, %v408, 0
      %v454 = vsel %vm413, %v409, 0
      %v457 = vsel %vm413, %v410, 0
      %v460 = vsel %vm413, %v411, 0
      %vm462 = vcmask 1041408
      %v464 = vsel %vm462, %v412, 0
      %466 = vmatpush.bf16.msra.mxu0 0
      %467 = vmatpush.bf16.msra.mxu0 0
      %468 = vmatpush.bf16.msra.mxu0 0
      %469 = vmatpush.bf16.msra.mxu0 0
      %470 = vmatpush.bf16.msra.mxu0 0
      %471 = vmatpush.bf16.msra.mxu0 0
      %472 = vmatpush.bf16.msra.mxu0 0
      %473 = vmatpush.bf16.msra.mxu0 %v464
      %474 = vmatmul.bf16.gmra.mxu0 %v415
      %v475 = vpop.f32.mrf.mxu0
      %v476 = vadd.f32 0.0, %v475
      %v477 = vpop.f32.mrf.mxu0
      %v478 = vadd.f32 0.0, %v477
      %479 = vmatmul.bf16.gmra.mxu0 %v418
      %v480 = vpop.f32.mrf.mxu0
      %v481 = vadd.f32 0.0, %v480
      %v482 = vpop.f32.mrf.mxu0
      %v483 = vadd.f32 0.0, %v482
      %484 = vmatmul.bf16.gmra.mxu0 %v421
      %v485 = vpop.f32.mrf.mxu0
      %v486 = vadd.f32 0.0, %v485
      %v487 = vpop.f32.mrf.mxu0
      %v488 = vadd.f32 0.0, %v487
      %489 = vmatmul.bf16.gmra.mxu0 %v424
      %v490 = vpop.f32.mrf.mxu0
      %v491 = vadd.f32 0.0, %v490
      %v492 = vpop.f32.mrf.mxu0
      %v493 = vadd.f32 0.0, %v492
      %494 = vmatmul.bf16.gmra.mxu0 %v427
      %v495 = vpop.f32.mrf.mxu0
      %v496 = vadd.f32 0.0, %v495
      %v497 = vpop.f32.mrf.mxu0
      %v498 = vadd.f32 0.0, %v497
      %499 = vmatmul.bf16.gmra.mxu0 %v430
      %v500 = vpop.f32.mrf.mxu0
      %v501 = vadd.f32 0.0, %v500
      %v502 = vpop.f32.mrf.mxu0
      %v503 = vadd.f32 0.0, %v502
      %504 = vmatmul.bf16.gmra.mxu0 %v433
      %v505 = vpop.f32.mrf.mxu0
      %v506 = vadd.f32 0.0, %v505
      %v507 = vpop.f32.mrf.mxu0
      %v508 = vadd.f32 0.0, %v507
      %509 = vmatmul.bf16.gmra.mxu0 %v436
      %v510 = vpop.f32.mrf.mxu0
      %v511 = vadd.f32 0.0, %v510
      %v512 = vpop.f32.mrf.mxu0
      %v513 = vadd.f32 0.0, %v512
      %514 = vmatmul.bf16.gmra.mxu0 %v439
      %v515 = vpop.f32.mrf.mxu0
      %v516 = vadd.f32 0.0, %v515
      %v517 = vpop.f32.mrf.mxu0
      %v518 = vadd.f32 0.0, %v517
      %519 = vmatmul.bf16.gmra.mxu0 %v442
      %v520 = vpop.f32.mrf.mxu0
      %v521 = vadd.f32 0.0, %v520
      %v522 = vpop.f32.mrf.mxu0
      %v523 = vadd.f32 0.0, %v522
      %524 = vmatmul.bf16.gmra.mxu0 %v445
      %v525 = vpop.f32.mrf.mxu0
      %v526 = vadd.f32 0.0, %v525
      %v527 = vpop.f32.mrf.mxu0
      %v528 = vadd.f32 0.0, %v527
      %529 = vmatmul.bf16.gmra.mxu0 %v448
      %v530 = vpop.f32.mrf.mxu0
      %v531 = vadd.f32 0.0, %v530
      %v532 = vpop.f32.mrf.mxu0
      %v533 = vadd.f32 0.0, %v532
      %534 = vmatmul.bf16.gmra.mxu0 %v451
      %v535 = vpop.f32.mrf.mxu0
      %v536 = vadd.f32 0.0, %v535
      %v537 = vpop.f32.mrf.mxu0
      %v538 = vadd.f32 0.0, %v537
      %539 = vmatmul.bf16.gmra.mxu0 %v454
      %v540 = vpop.f32.mrf.mxu0
      %v541 = vadd.f32 0.0, %v540
      %v542 = vpop.f32.mrf.mxu0
      %v543 = vadd.f32 0.0, %v542
      %544 = vmatmul.bf16.gmra.mxu0 %v457
      %v545 = vpop.f32.mrf.mxu0
      %v546 = vadd.f32 0.0, %v545
      %v547 = vpop.f32.mrf.mxu0
      %v548 = vadd.f32 0.0, %v547
      %549 = vmatmul.bf16.gmra.mxu0 %v460
      %v550 = vpop.f32.mrf.mxu0
      %v551 = vadd.f32 0.0, %v550
      %v552 = vpop.f32.mrf.mxu0
      %v553 = vadd.f32 0.0, %v552
      %554 = vdwg.mxu0
      %v555 = vadd.f32 %v332, %v476
      %v556 = vadd.f32 %v333, %v478
      %v557 = vadd.f32 %v334, %v481
      %v558 = vadd.f32 %v335, %v483
      %v559 = vadd.f32 %v336, %v486
      %v560 = vadd.f32 %v337, %v488
      %v561 = vadd.f32 %v338, %v491
      %v562 = vadd.f32 %v339, %v493
      %v563 = vadd.f32 %v340, %v496
      %v564 = vadd.f32 %v341, %v498
      %v565 = vadd.f32 %v342, %v501
      %v566 = vadd.f32 %v343, %v503
      %v567 = vadd.f32 %v344, %v506
      %v568 = vadd.f32 %v345, %v508
      %v569 = vadd.f32 %v346, %v511
      %v570 = vadd.f32 %v347, %v513
      %v571 = vadd.f32 %v348, %v516
      %v572 = vadd.f32 %v349, %v518
      %v573 = vadd.f32 %v350, %v521
      %v574 = vadd.f32 %v351, %v523
      %v575 = vadd.f32 %v352, %v526
      %v576 = vadd.f32 %v353, %v528
      %v577 = vadd.f32 %v354, %v531
      %v578 = vadd.f32 %v355, %v533
      %v579 = vadd.f32 %v356, %v536
      %v580 = vadd.f32 %v357, %v538
      %v581 = vadd.f32 %v358, %v541
      %v582 = vadd.f32 %v359, %v543
      %v583 = vadd.f32 %v360, %v546
      %v584 = vadd.f32 %v361, %v548
      %v585 = vadd.f32 %v362, %v551
      %v586 = vadd.f32 %v363, %v553
      %587 = vst [vmem:[#allocation2] sm:$0xff] %v555
      %588 = vst [vmem:[#allocation2 + $0x8] sm:$0xff] %v556
      %589 = vst [vmem:[#allocation2 + $0x10] sm:$0xff] %v557
      %590 = vst [vmem:[#allocation2 + $0x18] sm:$0xff] %v558
      %591 = vst [vmem:[#allocation2 + $0x20] sm:$0xff] %v559
      %592 = vst [vmem:[#allocation2 + $0x28] sm:$0xff] %v560
      %593 = vst [vmem:[#allocation2 + $0x30] sm:$0xff] %v561
      %594 = vst [vmem:[#allocation2 + $0x38] sm:$0xff] %v562
      %595 = vst [vmem:[#allocation2 + $0x40] sm:$0xff] %v563
      %596 = vst [vmem:[#allocation2 + $0x48] sm:$0xff] %v564
      %597 = vst [vmem:[#allocation2 + $0x50] sm:$0xff] %v565
      %598 = vst [vmem:[#allocation2 + $0x58] sm:$0xff] %v566
      %599 = vst [vmem:[#allocation2 + $0x60] sm:$0xff] %v567
      %600 = vst [vmem:[#allocation2 + $0x68] sm:$0xff] %v568
      %601 = vst [vmem:[#allocation2 + $0x70] sm:$0xff] %v569
      %602 = vst [vmem:[#allocation2 + $0x78] sm:$0xff] %v570
      %603 = vst [vmem:[#allocation2 + $0x80] sm:$0xff] %v571
      %604 = vst [vmem:[#allocation2 + $0x88] sm:$0xff] %v572
      %605 = vst [vmem:[#allocation2 + $0x90] sm:$0xff] %v573
      %606 = vst [vmem:[#allocation2 + $0x98] sm:$0xff] %v574
      %607 = vst [vmem:[#allocation2 + $0xa0] sm:$0xff] %v575
      %608 = vst [vmem:[#allocation2 + $0xa8] sm:$0xff] %v576
      %609 = vst [vmem:[#allocation2 + $0xb0] sm:$0xff] %v577
      %610 = vst [vmem:[#allocation2 + $0xb8] sm:$0xff] %v578
      %611 = vst [vmem:[#allocation2 + $0xc0] sm:$0xff] %v579
      %612 = vst [vmem:[#allocation2 + $0xc8] sm:$0xff] %v580
      %613 = vst [vmem:[#allocation2 + $0xd0] sm:$0xff] %v581
      %614 = vst [vmem:[#allocation2 + $0xd8] sm:$0xff] %v582
      %615 = vst [vmem:[#allocation2 + $0xe0] sm:$0xff] %v583
      %616 = vst [vmem:[#allocation2 + $0xe8] sm:$0xff] %v584
      %617 = vst [vmem:[#allocation2 + $0xf0] sm:$0xff] %v585
      %618 = vst [vmem:[#allocation2 + $0xf8] sm:$0xff] %v586
      // Predicated region
      $region41: #{_lambda_.4} parent=35 // pred_check
        %p619 = pneg %p296
      $region42: #{_lambda_.4} parent=35 // pred_check_branch
        %621 = sbr.rel (%p619) target = $region44
      $region43: #{_lambda_.4} parent=35 // pred_region
        %v622 = vld [vmem:[#allocation2] sm:$0xff]
        %v623 = vld [vmem:[#allocation2 + $0x8] sm:$0xff]
        %v624 = vld [vmem:[#allocation2 + $0x10] sm:$0xff]
        %v625 = vld [vmem:[#allocation2 + $0x18] sm:$0xff]
        %v626 = vld [vmem:[#allocation2 + $0x20] sm:$0xff]
        %v627 = vld [vmem:[#allocation2 + $0x28] sm:$0xff]
        %v628 = vld [vmem:[#allocation2 + $0x30] sm:$0xff]
        %v629 = vld [vmem:[#allocation2 + $0x38] sm:$0xff]
        %v630 = vld [vmem:[#allocation2 + $0x40] sm:$0xff]
        %v631 = vld [vmem:[#allocation2 + $0x48] sm:$0xff]
        %v632 = vld [vmem:[#allocation2 + $0x50] sm:$0xff]
        %v633 = vld [vmem:[#allocation2 + $0x58] sm:$0xff]
        %v634 = vld [vmem:[#allocation2 + $0x60] sm:$0xff]
        %v635 = vld [vmem:[#allocation2 + $0x68] sm:$0xff]
        %v636 = vld [vmem:[#allocation2 + $0x70] sm:$0xff]
        %v637 = vld [vmem:[#allocation2 + $0x78] sm:$0xff]
        %v638 = vld [vmem:[#allocation2 + $0x80] sm:$0xff]
        %v639 = vld [vmem:[#allocation2 + $0x88] sm:$0xff]
        %v640 = vld [vmem:[#allocation2 + $0x90] sm:$0xff]
        %v641 = vld [vmem:[#allocation2 + $0x98] sm:$0xff]
        %v642 = vld [vmem:[#allocation2 + $0xa0] sm:$0xff]
        %v643 = vld [vmem:[#allocation2 + $0xa8] sm:$0xff]
        %v644 = vld [vmem:[#allocation2 + $0xb0] sm:$0xff]
        %v645 = vld [vmem:[#allocation2 + $0xb8] sm:$0xff]
        %v646 = vld [vmem:[#allocation2 + $0xc0] sm:$0xff]
        %v647 = vld [vmem:[#allocation2 + $0xc8] sm:$0xff]
        %v648 = vld [vmem:[#allocation2 + $0xd0] sm:$0xff]
        %v649 = vld [vmem:[#allocation2 + $0xd8] sm:$0xff]
        %v650 = vld [vmem:[#allocation2 + $0xe0] sm:$0xff]
        %v651 = vld [vmem:[#allocation2 + $0xe8] sm:$0xff]
        %v652 = vld [vmem:[#allocation2 + $0xf0] sm:$0xff]
        %v653 = vld [vmem:[#allocation2 + $0xf8] sm:$0xff]
        %v654 = vld [vmem:[%s282] sm:$0x1]
        %v656 = vperm.slane %v654, 0
        %v658 = vmul.f32 %v622, %v656
        %v659 = vmul.f32 %v623, %v656
        %v660 = vmul.f32 %v624, %v656
        %v661 = vmul.f32 %v625, %v656
        %v662 = vmul.f32 %v626, %v656
        %v663 = vmul.f32 %v627, %v656
        %v664 = vmul.f32 %v628, %v656
        %v665 = vmul.f32 %v629, %v656
        %v666 = vmul.f32 %v630, %v656
        %v667 = vmul.f32 %v631, %v656
        %v668 = vmul.f32 %v632, %v656
        %v669 = vmul.f32 %v633, %v656
        %v670 = vmul.f32 %v634, %v656
        %v671 = vmul.f32 %v635, %v656
        %v672 = vmul.f32 %v636, %v656
        %v673 = vmul.f32 %v637, %v656
        %v674 = vmul.f32 %v638, %v656
        %v675 = vmul.f32 %v639, %v656
        %v676 = vmul.f32 %v640, %v656
        %v677 = vmul.f32 %v641, %v656
        %v678 = vmul.f32 %v642, %v656
        %v679 = vmul.f32 %v643, %v656
        %v680 = vmul.f32 %v644, %v656
        %v681 = vmul.f32 %v645, %v656
        %v682 = vmul.f32 %v646, %v656
        %v683 = vmul.f32 %v647, %v656
        %v684 = vmul.f32 %v648, %v656
        %v685 = vmul.f32 %v649, %v656
        %v686 = vmul.f32 %v650, %v656
        %v687 = vmul.f32 %v651, %v656
        %v688 = vmul.f32 %v652, %v656
        %v689 = vmul.f32 %v653, %v656
        %v690 = vld [vmem:[%s285] sm:$0x1]
        %v692 = vperm.slane %v690, 0
        %v694 = vadd.f32 %v658, %v692
        %v695 = vadd.f32 %v659, %v692
        %v696 = vadd.f32 %v660, %v692
        %v697 = vadd.f32 %v661, %v692
        %v698 = vadd.f32 %v662, %v692
        %v699 = vadd.f32 %v663, %v692
        %v700 = vadd.f32 %v664, %v692
        %v701 = vadd.f32 %v665, %v692
        %v702 = vadd.f32 %v666, %v692
        %v703 = vadd.f32 %v667, %v692
        %v704 = vadd.f32 %v668, %v692
        %v705 = vadd.f32 %v669, %v692
        %v706 = vadd.f32 %v670, %v692
        %v707 = vadd.f32 %v671, %v692
        %v708 = vadd.f32 %v672, %v692
        %v709 = vadd.f32 %v673, %v692
        %v710 = vadd.f32 %v674, %v692
        %v711 = vadd.f32 %v675, %v692
        %v712 = vadd.f32 %v676, %v692
        %v713 = vadd.f32 %v677, %v692
        %v714 = vadd.f32 %v678, %v692
        %v715 = vadd.f32 %v679, %v692
        %v716 = vadd.f32 %v680, %v692
        %v717 = vadd.f32 %v681, %v692
        %v718 = vadd.f32 %v682, %v692
        %v719 = vadd.f32 %v683, %v692
        %v720 = vadd.f32 %v684, %v692
        %v721 = vadd.f32 %v685, %v692
        %v722 = vadd.f32 %v686, %v692
        %v723 = vadd.f32 %v687, %v692
        %v724 = vadd.f32 %v688, %v692
        %v725 = vadd.f32 %v689, %v692
        %v726 = vmax.f32 %v694, 0.0
        %v727 = vmax.f32 %v695, 0.0
        %v728 = vmax.f32 %v696, 0.0
        %v729 = vmax.f32 %v697, 0.0
        %v730 = vmax.f32 %v698, 0.0
        %v731 = vmax.f32 %v699, 0.0
        %v732 = vmax.f32 %v700, 0.0
        %v733 = vmax.f32 %v701, 0.0
        %v734 = vmax.f32 %v702, 0.0
        %v735 = vmax.f32 %v703, 0.0
        %v736 = vmax.f32 %v704, 0.0
        %v737 = vmax.f32 %v705, 0.0
        %v738 = vmax.f32 %v706, 0.0
        %v739 = vmax.f32 %v707, 0.0
        %v740 = vmax.f32 %v708, 0.0
        %v741 = vmax.f32 %v709, 0.0
        %v742 = vmax.f32 %v710, 0.0
        %v743 = vmax.f32 %v711, 0.0
        %v744 = vmax.f32 %v712, 0.0
        %v745 = vmax.f32 %v713, 0.0
        %v746 = vmax.f32 %v714, 0.0
        %v747 = vmax.f32 %v715, 0.0
        %v748 = vmax.f32 %v716, 0.0
        %v749 = vmax.f32 %v717, 0.0
        %v750 = vmax.f32 %v718, 0.0
        %v751 = vmax.f32 %v719, 0.0
        %v752 = vmax.f32 %v720, 0.0
        %v753 = vmax.f32 %v721, 0.0
        %v754 = vmax.f32 %v722, 0.0
        %v755 = vmax.f32 %v723, 0.0
        %v756 = vmax.f32 %v724, 0.0
        %v757 = vmax.f32 %v725, 0.0
        %v758 = vpack.c.bf16 %v726, %v726
        %v759 = vpack.c.bf16 %v727, %v727
        %v760 = vpack.c.bf16 %v728, %v728
        %v761 = vpack.c.bf16 %v729, %v729
        %v762 = vpack.c.bf16 %v730, %v730
        %v763 = vpack.c.bf16 %v731, %v731
        %v764 = vpack.c.bf16 %v732, %v732
        %v765 = vpack.c.bf16 %v733, %v733
        %v766 = vpack.c.bf16 %v734, %v734
        %v767 = vpack.c.bf16 %v735, %v735
        %v768 = vpack.c.bf16 %v736, %v736
        %v769 = vpack.c.bf16 %v737, %v737
        %v770 = vpack.c.bf16 %v738, %v738
        %v771 = vpack.c.bf16 %v739, %v739
        %v772 = vpack.c.bf16 %v740, %v740
        %v773 = vpack.c.bf16 %v741, %v741
        %v774 = vpack.c.bf16 %v742, %v742
        %v775 = vpack.c.bf16 %v743, %v743
        %v776 = vpack.c.bf16 %v744, %v744
        %v777 = vpack.c.bf16 %v745, %v745
        %v778 = vpack.c.bf16 %v746, %v746
        %v779 = vpack.c.bf16 %v747, %v747
        %v780 = vpack.c.bf16 %v748, %v748
        %v781 = vpack.c.bf16 %v749, %v749
        %v782 = vpack.c.bf16 %v750, %v750
        %v783 = vpack.c.bf16 %v751, %v751
        %v784 = vpack.c.bf16 %v752, %v752
        %v785 = vpack.c.bf16 %v753, %v753
        %v786 = vpack.c.bf16 %v754, %v754
        %v787 = vpack.c.bf16 %v755, %v755
        %v788 = vpack.c.bf16 %v756, %v756
        %v789 = vpack.c.bf16 %v757, %v757
        %790 = vst [vmem:[%s293] sm:$0xf] %v758
        %791 = vst [vmem:[%s293 + $0x4] sm:$0xf] %v759
        %792 = vst [vmem:[%s293 + $0x8] sm:$0xf] %v760
        %793 = vst [vmem:[%s293 + $0xc] sm:$0xf] %v761
        %794 = vst [vmem:[%s293 + $0x10] sm:$0xf] %v762
        %795 = vst [vmem:[%s293 + $0x14] sm:$0xf] %v763
        %796 = vst [vmem:[%s293 + $0x18] sm:$0xf] %v764
        %797 = vst [vmem:[%s293 + $0x1c] sm:$0xf] %v765
        %798 = vst [vmem:[%s293 + $0x20] sm:$0xf] %v766
        %799 = vst [vmem:[%s293 + $0x24] sm:$0xf] %v767
        %800 = vst [vmem:[%s293 + $0x28] sm:$0xf] %v768
        %801 = vst [vmem:[%s293 + $0x2c] sm:$0xf] %v769
        %802 = vst [vmem:[%s293 + $0x30] sm:$0xf] %v770
        %803 = vst [vmem:[%s293 + $0x34] sm:$0xf] %v771
        %804 = vst [vmem:[%s293 + $0x38] sm:$0xf] %v772
        %805 = vst [vmem:[%s293 + $0x3c] sm:$0xf] %v773
        %806 = vst [vmem:[%s293 + $0x40] sm:$0xf] %v774
        %807 = vst [vmem:[%s293 + $0x44] sm:$0xf] %v775
        %808 = vst [vmem:[%s293 + $0x48] sm:$0xf] %v776
        %809 = vst [vmem:[%s293 + $0x4c] sm:$0xf] %v777
        %810 = vst [vmem:[%s293 + $0x50] sm:$0xf] %v778
        %811 = vst [vmem:[%s293 + $0x54] sm:$0xf] %v779
        %812 = vst [vmem:[%s293 + $0x58] sm:$0xf] %v780
        %813 = vst [vmem:[%s293 + $0x5c] sm:$0xf] %v781
        %814 = vst [vmem:[%s293 + $0x60] sm:$0xf] %v782
        %815 = vst [vmem:[%s293 + $0x64] sm:$0xf] %v783
        %816 = vst [vmem:[%s293 + $0x68] sm:$0xf] %v784
        %817 = vst [vmem:[%s293 + $0x6c] sm:$0xf] %v785
        %818 = vst [vmem:[%s293 + $0x70] sm:$0xf] %v786
        %819 = vst [vmem:[%s293 + $0x74] sm:$0xf] %v787
        %820 = vst [vmem:[%s293 + $0x78] sm:$0xf] %v788
        %821 = vst [vmem:[%s293 + $0x7c] sm:$0xf] %v789
      $region44: #{_lambda_.4} parent=35 // pred_fallthru
        _
      %s822 = smul.u32 32, %s20
      %p823 = scmp.lt.s32.totalorder %s822, 63
      %s824 = scalar_select %p823, %s822, 63
      %p825 = scmp.lt.s32.totalorder %s21, 0
      %s826 = scalar_select %p825, %s21, 0
      %s827 = sadd.s32 %s826, %s824
      %s828 = smul.addr %s827, 4
      %s829 = scalar_lea.vmem %s4, %s828
      // Predicated region
      $region45: #{_lambda_.4} parent=35 // pred_check
        %p830 = pneg %p162
      $region46: #{_lambda_.4} parent=35 // pred_check_branch
        %832 = sbr.rel (%p830) target = $region48
      $region47: #{_lambda_.4} parent=35 // pred_region
        %s833 = smul.u32 32, %s20
      $region48: #{_lambda_.4} parent=35 // pred_fallthru
        _
    $region36: #{_lambda_.4} parent=5 // pred_fallthru
      _
    %p834 = scmp.le.s32.totalorder 2, %s10
    // Predicated region
    $region49: #{_lambda_.4} parent=5 // pred_check
      %p835 = pneg %p834
    $region50: #{_lambda_.4} parent=5 // pred_check_branch
      %837 = sbr.rel (%p835) target = $region52
    $region51: #{_lambda_.4} parent=5 // pred_region
      %s838 = ssub.s32 %s10, 2
      // Predicated region
      $region53: #{_lambda_.4} parent=51 // pred_check
        %p839 = pneg %p168
      $region54: #{_lambda_.4} parent=51 // pred_check_branch
        %841 = sbr.rel (%p839) target = $region56
      $region55: #{_lambda_.4} parent=51 // pred_region
        %s842 = smul.u32 32, %s23
        %p843 = scmp.lt.s32.totalorder %s842, 63
        %s844 = scalar_select %p843, %s842, 63
        %p845 = scmp.lt.s32.totalorder %s24, 0
        %s846 = scalar_select %p845, %s24, 0
        %s847 = sadd.s32 %s846, %s844
        %s848 = smul.addr %s847, 4
        %s849 = scalar_lea.vmem %s4, %s848
      $region56: #{_lambda_.4} parent=51 // pred_fallthru
        _
    $region52: #{_lambda_.4} parent=5 // pred_fallthru
      _
  $region6: #{_lambda_.4} parent=0 // loop_footer
    %s14 = sadd.s32 1, %s10
  $region7: #{_lambda_.4} parent=0 // loop_footer_branch
    %9 = sbr.rel target = $region3
  $region8: #{_lambda_.4} parent=0 // loop_exit
    _

// kernel: _lambda_.6
$region0: #{_lambda_.6}
  #allocation0 [shape = 'u32[]', space=smem, size = 0x4, offset = 0x4, fixed_abs, tag = 'smem constant byte address 0x4 - core index']
  #allocation1 [shape = 'u32[72,128]{1,0:T(1,128)}', space=vmem, size = 0x9000, scoped, tag = 'internal scratch']
  #allocation2 [shape = 'f32[128,128]{1,0:T(8,128)}', space=vmem, size = 0x10000, scoped, tag = 'scratch operand']
  %s0 = inlined_call_operand.vmem [shape: f32[128,4], index: 0, kind: input, shape index: {}]
  %s1 = inlined_call_operand.vmem [shape: bf16[4,128], index: 1, kind: input, shape index: {}]
  %s2 = inlined_call_operand.vmem [shape: f32[1,128], index: 2, kind: input, shape index: {}]
  %s3 = inlined_call_operand.vmem [shape: f32[1,128], index: 3, kind: input, shape index: {}]
  %s4 = inlined_call_operand.vmem [shape: f32[128,128], index: 4, kind: output, shape index: {}]
  %s5 = sld [smem:[#allocation0]]
  $region34: #{_lambda_.6} parent=0
    _
  %s7 = ssub.s32 1, %s5
  %s8 = scalar_select 0, %s7, %s5
  // Predicated region
  $region2: #{_lambda_.6} parent=0 // pred_check
    _
  $region3: #{_lambda_.6} parent=0 // pred_check_branch
    %10 = sbr.rel (0) target = $region5
  $region4: #{_lambda_.6} parent=0 // pred_region
    _
  $region5: #{_lambda_.6} parent=0 // pred_fallthru
    _
  // Predicated region
  $region6: #{_lambda_.6} parent=0 // pred_check
    _
  $region7: #{_lambda_.6} parent=0 // pred_check_branch
    %12 = sbr.rel (0) target = $region9
  $region8: #{_lambda_.6} parent=0 // pred_region
    _
  $region9: #{_lambda_.6} parent=0 // pred_fallthru
    _
  // Predicated region
  $region10: #{_lambda_.6} parent=0 // pred_check
    _
  $region11: #{_lambda_.6} parent=0 // pred_check_branch
    %14 = sbr.rel (0) target = $region13
  $region12: #{_lambda_.6} parent=0 // pred_region
    _
  $region13: #{_lambda_.6} parent=0 // pred_fallthru
    _
  // Predicated region
  $region14: #{_lambda_.6} parent=0 // pred_check
    _
  $region15: #{_lambda_.6} parent=0 // pred_check_branch
    %16 = sbr.rel (0) target = $region17
  $region16: #{_lambda_.6} parent=0 // pred_region
    _
  $region17: #{_lambda_.6} parent=0 // pred_fallthru
    _
  %p18 = scmp.eq.s32.totalorder 0, 0
  // Predicated region
  $region18: #{_lambda_.6} parent=0 // pred_check
    %p19 = pneg %p18
  $region19: #{_lambda_.6} parent=0 // pred_check_branch
    %21 = sbr.rel (%p19) target = $region21
  $region20: #{_lambda_.6} parent=0 // pred_region
    %22 = vst [vmem:[#allocation2] sm:$0xff] 0.0
    %23 = vst [vmem:[#allocation2 + $0x8] sm:$0xff] 0.0
    %24 = vst [vmem:[#allocation2 + $0x10] sm:$0xff] 0.0
    %25 = vst [vmem:[#allocation2 + $0x18] sm:$0xff] 0.0
    %26 = vst [vmem:[#allocation2 + $0x20] sm:$0xff] 0.0
    %27 = vst [vmem:[#allocation2 + $0x28] sm:$0xff] 0.0
    %28 = vst [vmem:[#allocation2 + $0x30] sm:$0xff] 0.0
    %29 = vst [vmem:[#allocation2 + $0x38] sm:$0xff] 0.0
    %30 = vst [vmem:[#allocation2 + $0x40] sm:$0xff] 0.0
    %31 = vst [vmem:[#allocation2 + $0x48] sm:$0xff] 0.0
    %32 = vst [vmem:[#allocation2 + $0x50] sm:$0xff] 0.0
    %33 = vst [vmem:[#allocation2 + $0x58] sm:$0xff] 0.0
    %34 = vst [vmem:[#allocation2 + $0x60] sm:$0xff] 0.0
    %35 = vst [vmem:[#allocation2 + $0x68] sm:$0xff] 0.0
    %36 = vst [vmem:[#allocation2 + $0x70] sm:$0xff] 0.0
    %37 = vst [vmem:[#allocation2 + $0x78] sm:$0xff] 0.0
  $region21: #{_lambda_.6} parent=0 // pred_fallthru
    _
  %v38 = vld [vmem:[#allocation2] sm:$0xff]
  %v39 = vld [vmem:[#allocation2 + $0x8] sm:$0xff]
  %v40 = vld [vmem:[#allocation2 + $0x10] sm:$0xff]
  %v41 = vld [vmem:[#allocation2 + $0x18] sm:$0xff]
  %v42 = vld [vmem:[#allocation2 + $0x20] sm:$0xff]
  %v43 = vld [vmem:[#allocation2 + $0x28] sm:$0xff]
  %v44 = vld [vmem:[#allocation2 + $0x30] sm:$0xff]
  %v45 = vld [vmem:[#allocation2 + $0x38] sm:$0xff]
  %v46 = vld [vmem:[#allocation2 + $0x40] sm:$0xff]
  %v47 = vld [vmem:[#allocation2 + $0x48] sm:$0xff]
  %v48 = vld [vmem:[#allocation2 + $0x50] sm:$0xff]
  %v49 = vld [vmem:[#allocation2 + $0x58] sm:$0xff]
  %v50 = vld [vmem:[#allocation2 + $0x60] sm:$0xff]
  %v51 = vld [vmem:[#allocation2 + $0x68] sm:$0xff]
  %v52 = vld [vmem:[#allocation2 + $0x70] sm:$0xff]
  %v53 = vld [vmem:[#allocation2 + $0x78] sm:$0xff]
  %v54 = vld [vmem:[%s0] sm:$0xff]
  %v55 = vld [vmem:[%s0 + $0x8] sm:$0xff]
  %v56 = vld [vmem:[%s0 + $0x10] sm:$0xff]
  %v57 = vld [vmem:[%s0 + $0x18] sm:$0xff]
  %v58 = vld [vmem:[%s0 + $0x20] sm:$0xff]
  %v59 = vld [vmem:[%s0 + $0x28] sm:$0xff]
  %v60 = vld [vmem:[%s0 + $0x30] sm:$0xff]
  %v61 = vld [vmem:[%s0 + $0x38] sm:$0xff]
  %v62 = vld [vmem:[%s0 + $0x40] sm:$0xff]
  %v63 = vld [vmem:[%s0 + $0x48] sm:$0xff]
  %v64 = vld [vmem:[%s0 + $0x50] sm:$0xff]
  %v65 = vld [vmem:[%s0 + $0x58] sm:$0xff]
  %v66 = vld [vmem:[%s0 + $0x60] sm:$0xff]
  %v67 = vld [vmem:[%s0 + $0x68] sm:$0xff]
  %v68 = vld [vmem:[%s0 + $0x70] sm:$0xff]
  %v69 = vld [vmem:[%s0 + $0x78] sm:$0xff]
  %v70 = vpack.c.bf16 %v55, %v54
  %v71 = vpack.c.bf16 %v57, %v56
  %v72 = vpack.c.bf16 %v59, %v58
  %v73 = vpack.c.bf16 %v61, %v60
  %v74 = vpack.c.bf16 %v63, %v62
  %v75 = vpack.c.bf16 %v65, %v64
  %v76 = vpack.c.bf16 %v67, %v66
  %v77 = vpack.c.bf16 %v69, %v68
  %v78 = vld [vmem:[%s1] sm:$0x3]
  %vm79 = vcmask 31744
  %v81 = vsel %vm79, %v70, 0
  %v84 = vsel %vm79, %v71, 0
  %v87 = vsel %vm79, %v72, 0
  %v90 = vsel %vm79, %v73, 0
  %v93 = vsel %vm79, %v74, 0
  %v96 = vsel %vm79, %v75, 0
  %v99 = vsel %vm79, %v76, 0
  %v102 = vsel %vm79, %v77, 0
  %vm104 = vcmask 1041408
  %v106 = vsel %vm104, %v78, 0
  %108 = vmatpush.bf16.msra.mxu0 0
  %109 = vmatpush.bf16.msra.mxu0 0
  %110 = vmatpush.bf16.msra.mxu0 0
  %111 = vmatpush.bf16.msra.mxu0 0
  %112 = vmatpush.bf16.msra.mxu0 0
  %113 = vmatpush.bf16.msra.mxu0 0
  %114 = vmatpush.bf16.msra.mxu0 0
  %115 = vmatpush.bf16.msra.mxu0 %v106
  %116 = vmatmul.bf16.gmra.mxu0 %v81
  %v117 = vpop.f32.mrf.mxu0
  %v118 = vadd.f32 0.0, %v117
  %v119 = vpop.f32.mrf.mxu0
  %v120 = vadd.f32 0.0, %v119
  %121 = vmatmul.bf16.gmra.mxu0 %v84
  %v122 = vpop.f32.mrf.mxu0
  %v123 = vadd.f32 0.0, %v122
  %v124 = vpop.f32.mrf.mxu0
  %v125 = vadd.f32 0.0, %v124
  %126 = vmatmul.bf16.gmra.mxu0 %v87
  %v127 = vpop.f32.mrf.mxu0
  %v128 = vadd.f32 0.0, %v127
  %v129 = vpop.f32.mrf.mxu0
  %v130 = vadd.f32 0.0, %v129
  %131 = vmatmul.bf16.gmra.mxu0 %v90
  %v132 = vpop.f32.mrf.mxu0
  %v133 = vadd.f32 0.0, %v132
  %v134 = vpop.f32.mrf.mxu0
  %v135 = vadd.f32 0.0, %v134
  %136 = vmatmul.bf16.gmra.mxu0 %v93
  %v137 = vpop.f32.mrf.mxu0
  %v138 = vadd.f32 0.0, %v137
  %v139 = vpop.f32.mrf.mxu0
  %v140 = vadd.f32 0.0, %v139
  %141 = vmatmul.bf16.gmra.mxu0 %v96
  %v142 = vpop.f32.mrf.mxu0
  %v143 = vadd.f32 0.0, %v142
  %v144 = vpop.f32.mrf.mxu0
  %v145 = vadd.f32 0.0, %v144
  %146 = vmatmul.bf16.gmra.mxu0 %v99
  %v147 = vpop.f32.mrf.mxu0
  %v148 = vadd.f32 0.0, %v147
  %v149 = vpop.f32.mrf.mxu0
  %v150 = vadd.f32 0.0, %v149
  %151 = vmatmul.bf16.gmra.mxu0 %v102
  %v152 = vpop.f32.mrf.mxu0
  %v153 = vadd.f32 0.0, %v152
  %v154 = vpop.f32.mrf.mxu0
  %v155 = vadd.f32 0.0, %v154
  %156 = vdwg.mxu0
  %v157 = vadd.f32 %v38, %v118
  %v158 = vadd.f32 %v39, %v120
  %v159 = vadd.f32 %v40, %v123
  %v160 = vadd.f32 %v41, %v125
  %v161 = vadd.f32 %v42, %v128
  %v162 = vadd.f32 %v43, %v130
  %v163 = vadd.f32 %v44, %v133
  %v164 = vadd.f32 %v45, %v135
  %v165 = vadd.f32 %v46, %v138
  %v166 = vadd.f32 %v47, %v140
  %v167 = vadd.f32 %v48, %v143
  %v168 = vadd.f32 %v49, %v145
  %v169 = vadd.f32 %v50, %v148
  %v170 = vadd.f32 %v51, %v150
  %v171 = vadd.f32 %v52, %v153
  %v172 = vadd.f32 %v53, %v155
  %173 = vst [vmem:[#allocation2] sm:$0xff] %v157
  %174 = vst [vmem:[#allocation2 + $0x8] sm:$0xff] %v158
  %175 = vst [vmem:[#allocation2 + $0x10] sm:$0xff] %v159
  %176 = vst [vmem:[#allocation2 + $0x18] sm:$0xff] %v160
  %177 = vst [vmem:[#allocation2 + $0x20] sm:$0xff] %v161
  %178 = vst [vmem:[#allocation2 + $0x28] sm:$0xff] %v162
  %179 = vst [vmem:[#allocation2 + $0x30] sm:$0xff] %v163
  %180 = vst [vmem:[#allocation2 + $0x38] sm:$0xff] %v164
  %181 = vst [vmem:[#allocation2 + $0x40] sm:$0xff] %v165
  %182 = vst [vmem:[#allocation2 + $0x48] sm:$0xff] %v166
  %183 = vst [vmem:[#allocation2 + $0x50] sm:$0xff] %v167
  %184 = vst [vmem:[#allocation2 + $0x58] sm:$0xff] %v168
  %185 = vst [vmem:[#allocation2 + $0x60] sm:$0xff] %v169
  %186 = vst [vmem:[#allocation2 + $0x68] sm:$0xff] %v170
  %187 = vst [vmem:[#allocation2 + $0x70] sm:$0xff] %v171
  %188 = vst [vmem:[#allocation2 + $0x78] sm:$0xff] %v172
  // Predicated region
  $region22: #{_lambda_.6} parent=0 // pred_check
    %p189 = pneg %p18
  $region23: #{_lambda_.6} parent=0 // pred_check_branch
    %191 = sbr.rel (%p189) target = $region25
  $region24: #{_lambda_.6} parent=0 // pred_region
    %v192 = vld [vmem:[#allocation2] sm:$0xff]
    %v193 = vld [vmem:[#allocation2 + $0x8] sm:$0xff]
    %v194 = vld [vmem:[#allocation2 + $0x10] sm:$0xff]
    %v195 = vld [vmem:[#allocation2 + $0x18] sm:$0xff]
    %v196 = vld [vmem:[#allocation2 + $0x20] sm:$0xff]
    %v197 = vld [vmem:[#allocation2 + $0x28] sm:$0xff]
    %v198 = vld [vmem:[#allocation2 + $0x30] sm:$0xff]
    %v199 = vld [vmem:[#allocation2 + $0x38] sm:$0xff]
    %v200 = vld [vmem:[#allocation2 + $0x40] sm:$0xff]
    %v201 = vld [vmem:[#allocation2 + $0x48] sm:$0xff]
    %v202 = vld [vmem:[#allocation2 + $0x50] sm:$0xff]
    %v203 = vld [vmem:[#allocation2 + $0x58] sm:$0xff]
    %v204 = vld [vmem:[#allocation2 + $0x60] sm:$0xff]
    %v205 = vld [vmem:[#allocation2 + $0x68] sm:$0xff]
    %v206 = vld [vmem:[#allocation2 + $0x70] sm:$0xff]
    %v207 = vld [vmem:[#allocation2 + $0x78] sm:$0xff]
    %v208 = vld [vmem:[%s2] sm:$0x1]
    %v210 = vperm.slane %v208, 0
    %v212 = vmul.f32 %v192, %v210
    %v213 = vmul.f32 %v193, %v210
    %v214 = vmul.f32 %v194, %v210
    %v215 = vmul.f32 %v195, %v210
    %v216 = vmul.f32 %v196, %v210
    %v217 = vmul.f32 %v197, %v210
    %v218 = vmul.f32 %v198, %v210
    %v219 = vmul.f32 %v199, %v210
    %v220 = vmul.f32 %v200, %v210
    %v221 = vmul.f32 %v201, %v210
    %v222 = vmul.f32 %v202, %v210
    %v223 = vmul.f32 %v203, %v210
    %v224 = vmul.f32 %v204, %v210
    %v225 = vmul.f32 %v205, %v210
    %v226 = vmul.f32 %v206, %v210
    %v227 = vmul.f32 %v207, %v210
    %v228 = vld [vmem:[%s3] sm:$0x1]
    %v230 = vperm.slane %v228, 0
    %v232 = vadd.f32 %v212, %v230
    %v233 = vadd.f32 %v213, %v230
    %v234 = vadd.f32 %v214, %v230
    %v235 = vadd.f32 %v215, %v230
    %v236 = vadd.f32 %v216, %v230
    %v237 = vadd.f32 %v217, %v230
    %v238 = vadd.f32 %v218, %v230
    %v239 = vadd.f32 %v219, %v230
    %v240 = vadd.f32 %v220, %v230
    %v241 = vadd.f32 %v221, %v230
    %v242 = vadd.f32 %v222, %v230
    %v243 = vadd.f32 %v223, %v230
    %v244 = vadd.f32 %v224, %v230
    %v245 = vadd.f32 %v225, %v230
    %v246 = vadd.f32 %v226, %v230
    %v247 = vadd.f32 %v227, %v230
    %248 = vst [vmem:[%s4] sm:$0xff] %v232
    %249 = vst [vmem:[%s4 + $0x8] sm:$0xff] %v233
    %250 = vst [vmem:[%s4 + $0x10] sm:$0xff] %v234
    %251 = vst [vmem:[%s4 + $0x18] sm:$0xff] %v235
    %252 = vst [vmem:[%s4 + $0x20] sm:$0xff] %v236
    %253 = vst [vmem:[%s4 + $0x28] sm:$0xff] %v237
    %254 = vst [vmem:[%s4 + $0x30] sm:$0xff] %v238
    %255 = vst [vmem:[%s4 + $0x38] sm:$0xff] %v239
    %256 = vst [vmem:[%s4 + $0x40] sm:$0xff] %v240
    %257 = vst [vmem:[%s4 + $0x48] sm:$0xff] %v241
    %258 = vst [vmem:[%s4 + $0x50] sm:$0xff] %v242
    %259 = vst [vmem:[%s4 + $0x58] sm:$0xff] %v243
    %260 = vst [vmem:[%s4 + $0x60] sm:$0xff] %v244
    %261 = vst [vmem:[%s4 + $0x68] sm:$0xff] %v245
    %262 = vst [vmem:[%s4 + $0x70] sm:$0xff] %v246
    %263 = vst [vmem:[%s4 + $0x78] sm:$0xff] %v247
  $region25: #{_lambda_.6} parent=0 // pred_fallthru
    _
  // Predicated region
  $region26: #{_lambda_.6} parent=0 // pred_check
    _
  $region27: #{_lambda_.6} parent=0 // pred_check_branch
    %265 = sbr.rel (0) target = $region29
  $region28: #{_lambda_.6} parent=0 // pred_region
    _
  $region29: #{_lambda_.6} parent=0 // pred_fallthru
    _
  // Predicated region
  $region30: #{_lambda_.6} parent=0 // pred_check
    _
  $region31: #{_lambda_.6} parent=0 // pred_check_branch
    %267 = sbr.rel (0) target = $region33
  $region32: #{_lambda_.6} parent=0 // pred_region
    _
  $region33: #{_lambda_.6} parent=0 // pred_fallthru
    _

// kernel: _lambda_.7
$region0: #{_lambda_.7}
  #allocation0 [shape = 'u32[]', space=smem, size = 0x4, offset = 0x4, fixed_abs, tag = 'smem constant byte address 0x4 - core index']
  #allocation1 [shape = 'u32[72,128]{1,0:T(1,128)}', space=vmem, size = 0x9000, scoped, tag = 'internal scratch']
  #allocation2 [shape = 'f32[128,128]{1,0:T(8,128)}', space=vmem, size = 0x10000, scoped, tag = 'scratch operand']
  %s0 = inlined_call_operand.vmem [shape: bf16[128,8], index: 0, kind: input, shape index: {}]
  %s1 = inlined_call_operand.vmem [shape: bf16[8,128], index: 1, kind: input, shape index: {}]
  %s2 = inlined_call_operand.vmem [shape: f32[1,128], index: 2, kind: input, shape index: {}]
  %s3 = inlined_call_operand.vmem [shape: f32[1,128], index: 3, kind: input, shape index: {}]
  %s4 = inlined_call_operand.vmem [shape: f32[128,128], index: 4, kind: input, shape index: {}]
  %s5 = inlined_call_operand.hbm [shape: f32[128,128], index: 5, kind: output, shape index: {}]
  %s6 = sld [smem:[#allocation0]]
  $region38: #{_lambda_.7} parent=0
    _
  %s8 = ssub.s32 1, %s6
  %s9 = scalar_select 0, %s8, %s6
  $region1: #{_lambda_.7} parent=0
    #allocation3 [shape = 'u8[65536]{0}', space=vmem, size = 0x10000, scoped, tag = 'output window, operand 0, single buffered']
    #allocation4 [shape = 's32[1]{0}', space=sflag, size = 0x4, scoped, tag = 'scoped memory for _lambda_.7']
    %10 = vsyncpa [#allocation4], 0
    // Predicated region
    $region2: #{_lambda_.7} parent=1 // pred_check
      _
    $region3: #{_lambda_.7} parent=1 // pred_check_branch
      %12 = sbr.rel (0) target = $region5
    $region4: #{_lambda_.7} parent=1 // pred_region
      _
    $region5: #{_lambda_.7} parent=1 // pred_fallthru
      _
    // Predicated region
    $region6: #{_lambda_.7} parent=1 // pred_check
      _
    $region7: #{_lambda_.7} parent=1 // pred_check_branch
      %14 = sbr.rel (0) target = $region9
    $region8: #{_lambda_.7} parent=1 // pred_region
      _
    $region9: #{_lambda_.7} parent=1 // pred_fallthru
      _
    // Predicated region
    $region10: #{_lambda_.7} parent=1 // pred_check
      _
    $region11: #{_lambda_.7} parent=1 // pred_check_branch
      %16 = sbr.rel (0) target = $region13
    $region12: #{_lambda_.7} parent=1 // pred_region
      _
    $region13: #{_lambda_.7} parent=1 // pred_fallthru
      _
    // Predicated region
    $region14: #{_lambda_.7} parent=1 // pred_check
      _
    $region15: #{_lambda_.7} parent=1 // pred_check_branch
      %18 = sbr.rel (0) target = $region17
    $region16: #{_lambda_.7} parent=1 // pred_region
      _
    $region17: #{_lambda_.7} parent=1 // pred_fallthru
      _
    // Predicated region
    $region18: #{_lambda_.7} parent=1 // pred_check
      _
    $region19: #{_lambda_.7} parent=1 // pred_check_branch
      %20 = sbr.rel (0) target = $region21
    $region20: #{_lambda_.7} parent=1 // pred_region
      _
    $region21: #{_lambda_.7} parent=1 // pred_fallthru
      _
    %p22 = scmp.eq.s32.totalorder 0, 0
    // Predicated region
    $region22: #{_lambda_.7} parent=1 // pred_check
      %p23 = pneg %p22
    $region23: #{_lambda_.7} parent=1 // pred_check_branch
      %25 = sbr.rel (%p23) target = $region25
    $region24: #{_lambda_.7} parent=1 // pred_region
      %26 = vst [vmem:[#allocation2] sm:$0xff] 0.0
      %27 = vst [vmem:[#allocation2 + $0x8] sm:$0xff] 0.0
      %28 = vst [vmem:[#allocation2 + $0x10] sm:$0xff] 0.0
      %29 = vst [vmem:[#allocation2 + $0x18] sm:$0xff] 0.0
      %30 = vst [vmem:[#allocation2 + $0x20] sm:$0xff] 0.0
      %31 = vst [vmem:[#allocation2 + $0x28] sm:$0xff] 0.0
      %32 = vst [vmem:[#allocation2 + $0x30] sm:$0xff] 0.0
      %33 = vst [vmem:[#allocation2 + $0x38] sm:$0xff] 0.0
      %34 = vst [vmem:[#allocation2 + $0x40] sm:$0xff] 0.0
      %35 = vst [vmem:[#allocation2 + $0x48] sm:$0xff] 0.0
      %36 = vst [vmem:[#allocation2 + $0x50] sm:$0xff] 0.0
      %37 = vst [vmem:[#allocation2 + $0x58] sm:$0xff] 0.0
      %38 = vst [vmem:[#allocation2 + $0x60] sm:$0xff] 0.0
      %39 = vst [vmem:[#allocation2 + $0x68] sm:$0xff] 0.0
      %40 = vst [vmem:[#allocation2 + $0x70] sm:$0xff] 0.0
      %41 = vst [vmem:[#allocation2 + $0x78] sm:$0xff] 0.0
    $region25: #{_lambda_.7} parent=1 // pred_fallthru
      _
    %v42 = vld [vmem:[#allocation2] sm:$0xff]
    %v43 = vld [vmem:[#allocation2 + $0x8] sm:$0xff]
    %v44 = vld [vmem:[#allocation2 + $0x10] sm:$0xff]
    %v45 = vld [vmem:[#allocation2 + $0x18] sm:$0xff]
    %v46 = vld [vmem:[#allocation2 + $0x20] sm:$0xff]
    %v47 = vld [vmem:[#allocation2 + $0x28] sm:$0xff]
    %v48 = vld [vmem:[#allocation2 + $0x30] sm:$0xff]
    %v49 = vld [vmem:[#allocation2 + $0x38] sm:$0xff]
    %v50 = vld [vmem:[#allocation2 + $0x40] sm:$0xff]
    %v51 = vld [vmem:[#allocation2 + $0x48] sm:$0xff]
    %v52 = vld [vmem:[#allocation2 + $0x50] sm:$0xff]
    %v53 = vld [vmem:[#allocation2 + $0x58] sm:$0xff]
    %v54 = vld [vmem:[#allocation2 + $0x60] sm:$0xff]
    %v55 = vld [vmem:[#allocation2 + $0x68] sm:$0xff]
    %v56 = vld [vmem:[#allocation2 + $0x70] sm:$0xff]
    %v57 = vld [vmem:[#allocation2 + $0x78] sm:$0xff]
    %v58 = vld [vmem:[%s0] sm:$0xf]
    %v59 = vld [vmem:[%s0 + $0x4] sm:$0xf]
    %v60 = vld [vmem:[%s0 + $0x8] sm:$0xf]
    %v61 = vld [vmem:[%s0 + $0xc] sm:$0xf]
    %v62 = vld [vmem:[%s0 + $0x10] sm:$0xf]
    %v63 = vld [vmem:[%s0 + $0x14] sm:$0xf]
    %v64 = vld [vmem:[%s0 + $0x18] sm:$0xf]
    %v65 = vld [vmem:[%s0 + $0x1c] sm:$0xf]
    %v66 = vld [vmem:[%s0 + $0x20] sm:$0xf]
    %v67 = vld [vmem:[%s0 + $0x24] sm:$0xf]
    %v68 = vld [vmem:[%s0 + $0x28] sm:$0xf]
    %v69 = vld [vmem:[%s0 + $0x2c] sm:$0xf]
    %v70 = vld [vmem:[%s0 + $0x30] sm:$0xf]
    %v71 = vld [vmem:[%s0 + $0x34] sm:$0xf]
    %v72 = vld [vmem:[%s0 + $0x38] sm:$0xf]
    %v73 = vld [vmem:[%s0 + $0x3c] sm:$0xf]
    %v74 = vld [vmem:[%s1] sm:$0xf]
    %v91 = vunpack.c.l.b16 %v58
    %v92 = vunpack.c.l.b16 %v59
    %v93 = vunpack.c.l.b16 %v60
    %v94 = vunpack.c.l.b16 %v61
    %v95 = vunpack.c.l.b16 %v62
    %v96 = vunpack.c.l.b16 %v63
    %v97 = vunpack.c.l.b16 %v64
    %v98 = vunpack.c.l.b16 %v65
    %v99 = vunpack.c.l.b16 %v66
    %v100 = vunpack.c.l.b16 %v67
    %v101 = vunpack.c.l.b16 %v68
    %v102 = vunpack.c.l.b16 %v69
    %v103 = vunpack.c.l.b16 %v70
    %v104 = vunpack.c.l.b16 %v71
    %v105 = vunpack.c.l.b16 %v72
    %v106 = vunpack.c.l.b16 %v73
    %v107 = vpack.c.b16 %v92, %v91
    %v108 = vpack.c.b16 %v94, %v93
    %v109 = vpack.c.b16 %v96, %v95
    %v110 = vpack.c.b16 %v98, %v97
    %v111 = vpack.c.b16 %v100, %v99
    %v112 = vpack.c.b16 %v102, %v101
    %v113 = vpack.c.b16 %v104, %v103
    %v114 = vpack.c.b16 %v106, %v105
    %vm115 = vcmask 64512
    %v117 = vsel %vm115, %v107, 0
    %v120 = vsel %vm115, %v108, 0
    %v123 = vsel %vm115, %v109, 0
    %v126 = vsel %vm115, %v110, 0
    %v129 = vsel %vm115, %v111, 0
    %v132 = vsel %vm115, %v112, 0
    %v135 = vsel %vm115, %v113, 0
    %v138 = vsel %vm115, %v114, 0
    %vm140 = vcmask 1043456
    %v142 = vsel %vm140, %v74, 0
    %144 = vmatpush.bf16.msra.mxu0 0
    %145 = vmatpush.bf16.msra.mxu0 0
    %146 = vmatpush.bf16.msra.mxu0 0
    %147 = vmatpush.bf16.msra.mxu0 0
    %148 = vmatpush.bf16.msra.mxu0 0
    %149 = vmatpush.bf16.msra.mxu0 0
    %150 = vmatpush.bf16.msra.mxu0 0
    %151 = vmatpush.bf16.msra.mxu0 %v142
    %152 = vmatmul.bf16.gmra.mxu0 %v117
    %v153 = vpop.f32.mrf.mxu0
    %v154 = vadd.f32 0.0, %v153
    %v155 = vpop.f32.mrf.mxu0
    %v156 = vadd.f32 0.0, %v155
    %157 = vmatmul.bf16.gmra.mxu0 %v120
    %v158 = vpop.f32.mrf.mxu0
    %v159 = vadd.f32 0.0, %v158
    %v160 = vpop.f32.mrf.mxu0
    %v161 = vadd.f32 0.0, %v160
    %162 = vmatmul.bf16.gmra.mxu0 %v123
    %v163 = vpop.f32.mrf.mxu0
    %v164 = vadd.f32 0.0, %v163
    %v165 = vpop.f32.mrf.mxu0
    %v166 = vadd.f32 0.0, %v165
    %167 = vmatmul.bf16.gmra.mxu0 %v126
    %v168 = vpop.f32.mrf.mxu0
    %v169 = vadd.f32 0.0, %v168
    %v170 = vpop.f32.mrf.mxu0
    %v171 = vadd.f32 0.0, %v170
    %172 = vmatmul.bf16.gmra.mxu0 %v129
    %v173 = vpop.f32.mrf.mxu0
    %v174 = vadd.f32 0.0, %v173
    %v175 = vpop.f32.mrf.mxu0
    %v176 = vadd.f32 0.0, %v175
    %177 = vmatmul.bf16.gmra.mxu0 %v132
    %v178 = vpop.f32.mrf.mxu0
    %v179 = vadd.f32 0.0, %v178
    %v180 = vpop.f32.mrf.mxu0
    %v181 = vadd.f32 0.0, %v180
    %182 = vmatmul.bf16.gmra.mxu0 %v135
    %v183 = vpop.f32.mrf.mxu0
    %v184 = vadd.f32 0.0, %v183
    %v185 = vpop.f32.mrf.mxu0
    %v186 = vadd.f32 0.0, %v185
    %187 = vmatmul.bf16.gmra.mxu0 %v138
    %v188 = vpop.f32.mrf.mxu0
    %v189 = vadd.f32 0.0, %v188
    %v190 = vpop.f32.mrf.mxu0
    %v191 = vadd.f32 0.0, %v190
    %192 = vdwg.mxu0
    %v193 = vadd.f32 %v42, %v154
    %v194 = vadd.f32 %v43, %v156
    %v195 = vadd.f32 %v44, %v159
    %v196 = vadd.f32 %v45, %v161
    %v197 = vadd.f32 %v46, %v164
    %v198 = vadd.f32 %v47, %v166
    %v199 = vadd.f32 %v48, %v169
    %v200 = vadd.f32 %v49, %v171
    %v201 = vadd.f32 %v50, %v174
    %v202 = vadd.f32 %v51, %v176
    %v203 = vadd.f32 %v52, %v179
    %v204 = vadd.f32 %v53, %v181
    %v205 = vadd.f32 %v54, %v184
    %v206 = vadd.f32 %v55, %v186
    %v207 = vadd.f32 %v56, %v189
    %v208 = vadd.f32 %v57, %v191
    %209 = vst [vmem:[#allocation2] sm:$0xff] %v193
    %210 = vst [vmem:[#allocation2 + $0x8] sm:$0xff] %v194
    %211 = vst [vmem:[#allocation2 + $0x10] sm:$0xff] %v195
    %212 = vst [vmem:[#allocation2 + $0x18] sm:$0xff] %v196
    %213 = vst [vmem:[#allocation2 + $0x20] sm:$0xff] %v197
    %214 = vst [vmem:[#allocation2 + $0x28] sm:$0xff] %v198
    %215 = vst [vmem:[#allocation2 + $0x30] sm:$0xff] %v199
    %216 = vst [vmem:[#allocation2 + $0x38] sm:$0xff] %v200
    %217 = vst [vmem:[#allocation2 + $0x40] sm:$0xff] %v201
    %218 = vst [vmem:[#allocation2 + $0x48] sm:$0xff] %v202
    %219 = vst [vmem:[#allocation2 + $0x50] sm:$0xff] %v203
    %220 = vst [vmem:[#allocation2 + $0x58] sm:$0xff] %v204
    %221 = vst [vmem:[#allocation2 + $0x60] sm:$0xff] %v205
    %222 = vst [vmem:[#allocation2 + $0x68] sm:$0xff] %v206
    %223 = vst [vmem:[#allocation2 + $0x70] sm:$0xff] %v207
    %224 = vst [vmem:[#allocation2 + $0x78] sm:$0xff] %v208
    // Predicated region
    $region26: #{_lambda_.7} parent=1 // pred_check
      %p225 = pneg %p22
    $region27: #{_lambda_.7} parent=1 // pred_check_branch
      %227 = sbr.rel (%p225) target = $region29
    $region28: #{_lambda_.7} parent=1 // pred_region
      %v228 = vld [vmem:[#allocation2] sm:$0xff]
      %v229 = vld [vmem:[#allocation2 + $0x8] sm:$0xff]
      %v230 = vld [vmem:[#allocation2 + $0x10] sm:$0xff]
      %v231 = vld [vmem:[#allocation2 + $0x18] sm:$0xff]
      %v232 = vld [vmem:[#allocation2 + $0x20] sm:$0xff]
      %v233 = vld [vmem:[#allocation2 + $0x28] sm:$0xff]
      %v234 = vld [vmem:[#allocation2 + $0x30] sm:$0xff]
      %v235 = vld [vmem:[#allocation2 + $0x38] sm:$0xff]
      %v236 = vld [vmem:[#allocation2 + $0x40] sm:$0xff]
      %v237 = vld [vmem:[#allocation2 + $0x48] sm:$0xff]
      %v238 = vld [vmem:[#allocation2 + $0x50] sm:$0xff]
      %v239 = vld [vmem:[#allocation2 + $0x58] sm:$0xff]
      %v240 = vld [vmem:[#allocation2 + $0x60] sm:$0xff]
      %v241 = vld [vmem:[#allocation2 + $0x68] sm:$0xff]
      %v242 = vld [vmem:[#allocation2 + $0x70] sm:$0xff]
      %v243 = vld [vmem:[#allocation2 + $0x78] sm:$0xff]
      %v244 = vld [vmem:[%s2] sm:$0x1]
      %v246 = vperm.slane %v244, 0
      %v248 = vmul.f32 %v228, %v246
      %v249 = vmul.f32 %v229, %v246
      %v250 = vmul.f32 %v230, %v246
      %v251 = vmul.f32 %v231, %v246
      %v252 = vmul.f32 %v232, %v246
      %v253 = vmul.f32 %v233, %v246
      %v254 = vmul.f32 %v234, %v246
      %v255 = vmul.f32 %v235, %v246
      %v256 = vmul.f32 %v236, %v246
      %v257 = vmul.f32 %v237, %v246
      %v258 = vmul.f32 %v238, %v246
      %v259 = vmul.f32 %v239, %v246
      %v260 = vmul.f32 %v240, %v246
      %v261 = vmul.f32 %v241, %v246
      %v262 = vmul.f32 %v242, %v246
      %v263 = vmul.f32 %v243, %v246
      %v264 = vld [vmem:[%s3] sm:$0x1]
      %v266 = vperm.slane %v264, 0
      %v268 = vadd.f32 %v248, %v266
      %v269 = vadd.f32 %v249, %v266
      %v270 = vadd.f32 %v250, %v266
      %v271 = vadd.f32 %v251, %v266
      %v272 = vadd.f32 %v252, %v266
      %v273 = vadd.f32 %v253, %v266
      %v274 = vadd.f32 %v254, %v266
      %v275 = vadd.f32 %v255, %v266
      %v276 = vadd.f32 %v256, %v266
      %v277 = vadd.f32 %v257, %v266
      %v278 = vadd.f32 %v258, %v266
      %v279 = vadd.f32 %v259, %v266
      %v280 = vadd.f32 %v260, %v266
      %v281 = vadd.f32 %v261, %v266
      %v282 = vadd.f32 %v262, %v266
      %v283 = vadd.f32 %v263, %v266
      %v284 = vld [vmem:[%s4] sm:$0xff]
      %v285 = vld [vmem:[%s4 + $0x8] sm:$0xff]
      %v286 = vld [vmem:[%s4 + $0x10] sm:$0xff]
      %v287 = vld [vmem:[%s4 + $0x18] sm:$0xff]
      %v288 = vld [vmem:[%s4 + $0x20] sm:$0xff]
      %v289 = vld [vmem:[%s4 + $0x28] sm:$0xff]
      %v290 = vld [vmem:[%s4 + $0x30] sm:$0xff]
      %v291 = vld [vmem:[%s4 + $0x38] sm:$0xff]
      %v292 = vld [vmem:[%s4 + $0x40] sm:$0xff]
      %v293 = vld [vmem:[%s4 + $0x48] sm:$0xff]
      %v294 = vld [vmem:[%s4 + $0x50] sm:$0xff]
      %v295 = vld [vmem:[%s4 + $0x58] sm:$0xff]
      %v296 = vld [vmem:[%s4 + $0x60] sm:$0xff]
      %v297 = vld [vmem:[%s4 + $0x68] sm:$0xff]
      %v298 = vld [vmem:[%s4 + $0x70] sm:$0xff]
      %v299 = vld [vmem:[%s4 + $0x78] sm:$0xff]
      %v300 = vadd.f32 %v268, %v284
      %v301 = vadd.f32 %v269, %v285
      %v302 = vadd.f32 %v270, %v286
      %v303 = vadd.f32 %v271, %v287
      %v304 = vadd.f32 %v272, %v288
      %v305 = vadd.f32 %v273, %v289
      %v306 = vadd.f32 %v274, %v290
      %v307 = vadd.f32 %v275, %v291
      %v308 = vadd.f32 %v276, %v292
      %v309 = vadd.f32 %v277, %v293
      %v310 = vadd.f32 %v278, %v294
      %v311 = vadd.f32 %v279, %v295
      %v312 = vadd.f32 %v280, %v296
      %v313 = vadd.f32 %v281, %v297
      %v314 = vadd.f32 %v282, %v298
      %v315 = vadd.f32 %v283, %v299
      %v316 = vmax.f32 %v300, 0.0
      %v317 = vmax.f32 %v301, 0.0
      %v318 = vmax.f32 %v302, 0.0
      %v319 = vmax.f32 %v303, 0.0
      %v320 = vmax.f32 %v304, 0.0
      %v321 = vmax.f32 %v305, 0.0
      %v322 = vmax.f32 %v306, 0.0
      %v323 = vmax.f32 %v307, 0.0
      %v324 = vmax.f32 %v308, 0.0
      %v325 = vmax.f32 %v309, 0.0
      %v326 = vmax.f32 %v310, 0.0
      %v327 = vmax.f32 %v311, 0.0
      %v328 = vmax.f32 %v312, 0.0
      %v329 = vmax.f32 %v313, 0.0
      %v330 = vmax.f32 %v314, 0.0
      %v331 = vmax.f32 %v315, 0.0
      %332 = vst [vmem:[#allocation3] sm:$0xff] %v316
      %333 = vst [vmem:[#allocation3 + $0x8] sm:$0xff] %v317
      %334 = vst [vmem:[#allocation3 + $0x10] sm:$0xff] %v318
      %335 = vst [vmem:[#allocation3 + $0x18] sm:$0xff] %v319
      %336 = vst [vmem:[#allocation3 + $0x20] sm:$0xff] %v320
      %337 = vst [vmem:[#allocation3 + $0x28] sm:$0xff] %v321
      %338 = vst [vmem:[#allocation3 + $0x30] sm:$0xff] %v322
      %339 = vst [vmem:[#allocation3 + $0x38] sm:$0xff] %v323
      %340 = vst [vmem:[#allocation3 + $0x40] sm:$0xff] %v324
      %341 = vst [vmem:[#allocation3 + $0x48] sm:$0xff] %v325
      %342 = vst [vmem:[#allocation3 + $0x50] sm:$0xff] %v326
      %343 = vst [vmem:[#allocation3 + $0x58] sm:$0xff] %v327
      %344 = vst [vmem:[#allocation3 + $0x60] sm:$0xff] %v328
      %345 = vst [vmem:[#allocation3 + $0x68] sm:$0xff] %v329
      %346 = vst [vmem:[#allocation3 + $0x70] sm:$0xff] %v330
      %347 = vst [vmem:[#allocation3 + $0x78] sm:$0xff] %v331
    $region29: #{_lambda_.7} parent=1 // pred_fallthru
      _
    // Predicated region
    $region30: #{_lambda_.7} parent=1 // pred_check
      _
    $region31: #{_lambda_.7} parent=1 // pred_check_branch
      %349 = sbr.rel (0) target = $region33
    $region32: #{_lambda_.7} parent=1 // pred_region
      %351 = vsyncadd [#allocation4], 0
      %s352 = sshll.u32 [#allocation3], 4
      %s353 = int_to_ptr.vmem [resolvable:$true] %s352
      %s354 = sshll.u32 %s5, 4
      %s355 = int_to_ptr.hbm [resolvable:$true] %s354
      %360 = dma.vmem_to_hbm [thread:$0]  %s353, 2048, %s355, [#allocation4], 128, 128, 8
    $region33: #{_lambda_.7} parent=1 // pred_fallthru
      _
    // Predicated region
    $region34: #{_lambda_.7} parent=1 // pred_check
      _
    $region35: #{_lambda_.7} parent=1 // pred_check_branch
      %362 = sbr.rel (0) target = $region37
    $region36: #{_lambda_.7} parent=1 // pred_region
      %364 = dma.done [#allocation4], 2048
    $region37: #{_lambda_.7} parent=1 // pred_fallthru
      _
    %365 = vsyncpa [#allocation4], 1

</llo_original>
